<compile_context>
chip_gen: v7x
topology: tpu7x:2x2x1
jax: 0.10.0
libtpu: 0.0.40
codegen_flags: <defaults>
</compile_context>

<pallas_src>
import functools

import jax
import jax.numpy as jnp
from jax import lax
from jax.experimental import pallas as pl
from jax.experimental.pallas import tpu as pltpu


# ----------------------------- config (toy shapes) -----------------------------
VOCAB_SIZE = 128
HIDDEN = 32
MAX_POS = 64
TYPE_VOCAB = 2
PAD_TOKEN_ID = 0
LAYER_NORM_EPS = 1e-12
BATCH = 2
SEQ = 8
TILE_TOKENS = 8            # tokens per grid step; multiple of 8, divides SEQ


# --------------------------------- kernel -------------------------------------
def bert_embeddings_kernel(
    ids_ref,      # SMEM (N,)  int32   (scalar prefetch: flattened input_ids)
    past_ref,     # SMEM (1,)  int32   (scalar prefetch: past_key_values_length)
    tt_ref,       # VMEM (tile, 1) int32  (blocked token_type ids)
    word_hbm,     # ANY  (V, H) f32    (HBM-resident word table, manual gather)
    type_ref,     # VMEM (T, H) f32    (resident, tiny)
    pos_ref,      # VMEM (P, H) f32    (resident)
    gamma_ref,    # VMEM (1, H) f32
    beta_ref,     # VMEM (1, H) f32
    out_ref,      # VMEM (tile, H) f32 (blocked output)
    wrow_buf,     # VMEM (tile, H) f32 scratch: gathered word rows
    wrow_sem,     # DMA sems (tile,)
    *,
    tile: int,
    seq_len: int,
    eps: float,
):
    i = pl.program_id(0)
    base = i * tile

    # ---- word rows: issue all HBM -> VMEM row-gather DMAs first so they
    #      overlap the position / token-type VPU work below.
    copies = []
    for t in range(tile):                               # static unroll
        idx = ids_ref[base + t]                         # scalar from SMEM
        cp = pltpu.make_async_copy(word_hbm.at[idx], wrow_buf.at[t], wrow_sem.at[t])
        cp.start()
        copies.append(cp)

    # ---- position embeddings: contiguous (tile, H) slab at a dynamic offset
    #      (past is a runtime scalar -> no recompile per decode step).
    seq_start = past_ref[0] + (i % (seq_len // tile)) * tile
    x = pos_ref[pl.ds(seq_start, tile), :].astype(jnp.float32)      # (tile, H)

    # ---- token-type embeddings: cmp + select + add over the tiny type table.
    tts = tt_ref[...]                                               # (tile, 1)
    for t_id in range(type_ref.shape[0]):                           # static, T == 2
        row = type_ref[pl.ds(t_id, 1), :].astype(jnp.float32)       # (1, H)
        x = x + jnp.where(tts == t_id, row, 0.0)

    # ---- add gathered word rows once the DMAs have landed.
    for cp in copies:
        cp.wait()
    x = x + wrow_buf[...].astype(jnp.float32)

    # ---- LayerNorm over the hidden (lane) axis; dropout == identity (eval).
    mean = jnp.mean(x, axis=-1, keepdims=True)
    var = jnp.mean(jnp.square(x - mean), axis=-1, keepdims=True)
    y = (x - mean) * lax.rsqrt(var + eps)
    y = y * gamma_ref[...] + beta_ref[...]

    out_ref[...] = y.astype(out_ref.dtype)


# --------------------------------- wrapper ------------------------------------
def bert_embeddings_forward(
    params,
    input_ids,                 # (B, S) int32
    token_type_ids=None,       # (B, S) int32 or None
    past_key_values_length: int = 0,
    *,
    tile: int = TILE_TOKENS,
):
    B, S = input_ids.shape
    word = params["word"]                     # (V, H) f32
    type_ = params["type"]                    # (T, H) f32
    pos = params["pos"]                       # (P, H) f32
    gamma = params["gamma"].reshape(1, -1)    # (1, H)
    beta = params["beta"].reshape(1, -1)      # (1, H)
    V, H = word.shape
    T = type_.shape[0]
    P = pos.shape[0]
    N = B * S
    assert tile % 8 == 0 and S % tile == 0, "tile must be sublane-aligned and divide seq"

    if token_type_ids is None:
        # Matches the module's buffered zero token_type_ids path.
        token_type_ids = jnp.zeros((B, S), dtype=jnp.int32)

    ids_flat = input_ids.reshape(N).astype(jnp.int32)          # SMEM scalars
    tt_flat = token_type_ids.reshape(N, 1).astype(jnp.int32)   # VMEM mask math
    past = jnp.asarray([past_key_values_length], dtype=jnp.int32)

    kernel = functools.partial(
        bert_embeddings_kernel, tile=tile, seq_len=S, eps=LAYER_NORM_EPS)

    grid_spec = pltpu.PrefetchScalarGridSpec(
        num_scalar_prefetch=2,
        grid=(N // tile,),
        in_specs=[
            pl.BlockSpec((tile, 1), lambda i, ids, past: (i, 0)),   # token types
            pl.BlockSpec(memory_space=pl.ANY),                      # word table (HBM)
            pl.BlockSpec((T, H), lambda i, ids, past: (0, 0)),      # type table
            pl.BlockSpec((P, H), lambda i, ids, past: (0, 0)),      # position table
            pl.BlockSpec((1, H), lambda i, ids, past: (0, 0)),      # gamma
            pl.BlockSpec((1, H), lambda i, ids, past: (0, 0)),      # beta
        ],
        out_specs=pl.BlockSpec((tile, H), lambda i, ids, past: (i, 0)),
        scratch_shapes=[
            pltpu.VMEM((tile, H), word.dtype),
            pltpu.SemaphoreType.DMA((tile,)),
        ],
    )

    out_flat = pl.pallas_call(
        kernel,
        out_shape=jax.ShapeDtypeStruct((N, H), jnp.float32),
        grid_spec=grid_spec,
        compiler_params=pltpu.CompilerParams(
            dimension_semantics=("parallel",)),
    )(ids_flat, past, tt_flat, word, type_, pos, gamma, beta)

    # (B, S, H) reshape is a free XLA-level view outside the kernel.
    return out_flat.reshape(B, S, H)


# ------------------------------ pure-JAX reference -----------------------------
def bert_embeddings_ref(params, input_ids, token_type_ids, past_key_values_length=0):
    S = input_ids.shape[1]
    w = jnp.take(params["word"], input_ids, axis=0)
    t = jnp.take(params["type"], token_type_ids, axis=0)
    p = params["pos"][past_key_values_length:past_key_values_length + S][None]
    x = w + t + p
    mean = x.mean(-1, keepdims=True)
    var = ((x - mean) ** 2).mean(-1, keepdims=True)
    y = (x - mean) * lax.rsqrt(var + LAYER_NORM_EPS)
    return y * params["gamma"] + params["beta"]


# ----------------------------------- main --------------------------------------
if __name__ == "__main__":
    key = jax.random.PRNGKey(0)
    k_w, k_t, k_p, k_ids, k_tt = jax.random.split(key, 5)

    word = jax.random.normal(k_w, (VOCAB_SIZE, HIDDEN), jnp.float32) * 0.02
    word = word.at[PAD_TOKEN_ID].set(0.0)  # nn.Embedding padding_idx zeros that row
    type_emb = jax.random.normal(k_t, (TYPE_VOCAB, HIDDEN), jnp.float32) * 0.02
    pos_emb = jax.random.normal(k_p, (MAX_POS, HIDDEN), jnp.float32) * 0.02
    gamma = jnp.ones((HIDDEN,), jnp.float32)   # PyTorch LayerNorm default init
    beta = jnp.zeros((HIDDEN,), jnp.float32)

    params = {"word": word, "type": type_emb, "pos": pos_emb,
              "gamma": gamma, "beta": beta}

    input_ids = jax.random.randint(k_ids, (BATCH, SEQ), 0, VOCAB_SIZE, jnp.int32)
    token_type_ids = jax.random.randint(k_tt, (BATCH, SEQ), 0, TYPE_VOCAB, jnp.int32)

    out = bert_embeddings_forward(params, input_ids, token_type_ids,
                                  past_key_values_length=0)
    out = jax.block_until_ready(out)

    ref = bert_embeddings_ref(params, input_ids, token_type_ids, 0)
    assert out.shape == (BATCH, SEQ, HIDDEN)
    assert jnp.allclose(out, ref, atol=1e-5, rtol=1e-5), "mismatch vs reference"

    print("KERNEL_OK")
</pallas_src>

<mosaic_0001>
module attributes {stable_mosaic.version = 11 : i64} {
  func.func @bert_embeddings_kernel(%arg0: i32, %arg1: memref<16xi32, #tpu.memory_space<smem>>, %arg2: memref<1xi32, #tpu.memory_space<smem>>, %arg3: memref<8x1xi32, #tpu.memory_space<vmem>>, %arg4: memref<128x32xf32, #tpu.memory_space<any>>, %arg5: memref<2x32xf32, #tpu.memory_space<vmem>>, %arg6: memref<64x32xf32, #tpu.memory_space<vmem>>, %arg7: memref<1x32xf32, #tpu.memory_space<vmem>>, %arg8: memref<1x32xf32, #tpu.memory_space<vmem>>, %arg9: memref<8x32xf32, #tpu.memory_space<vmem>>, %arg10: memref<8x32xf32, #tpu.memory_space<vmem>>, %arg11: memref<8x!tpu.dma_semaphore, #tpu.memory_space<semaphore_mem>>) attributes {dimension_semantics = [#tpu.dimension_semantics<parallel>], iteration_bounds = array<i64: 2>, scalar_prefetch = 2 : i64, scratch_operands = 2 : i64, tpu.core_type = #tpu.core_type<tc>, window_params = [{transform_indices = @transform_0, window_bounds = array<i64: 8, 1>}, {}, {pipeline_mode = #tpu.pipeline_mode<synchronous>, transform_indices = @transform_2, window_bounds = array<i64: 2, 32>}, {pipeline_mode = #tpu.pipeline_mode<synchronous>, transform_indices = @transform_3, window_bounds = array<i64: 64, 32>}, {pipeline_mode = #tpu.pipeline_mode<synchronous>, transform_indices = @transform_4, window_bounds = array<i64: 1, 32>}, {pipeline_mode = #tpu.pipeline_mode<synchronous>, transform_indices = @transform_5, window_bounds = array<i64: 1, 32>}, {transform_indices = @transform_6, window_bounds = array<i64: 8, 32>}]} {
    %c8_i32 = arith.constant 8 : i32
    %0 = arith.muli %arg0, %c8_i32 : i32
    %c0_i32 = arith.constant 0 : i32
    %1 = arith.addi %0, %c0_i32 : i32
    %2 = arith.index_cast %1 : i32 to index
    %3 = memref.load %arg1[%2] : memref<16xi32, #tpu.memory_space<smem>>
    %c0_i32_0 = arith.constant 0 : i32
    %c0_i32_1 = arith.constant 0 : i32
    %c0_i32_2 = arith.constant 0 : i32
    %4 = tpu.memref_slice %arg4[%3, %c0_i32_2] : memref<128x32xf32, #tpu.memory_space<any>> -> memref<1x32xf32, #tpu.memory_space<any>>
    %5 = tpu.memref_squeeze %4 : memref<1x32xf32, #tpu.memory_space<any>> -> memref<32xf32, #tpu.memory_space<any>>
    %c0_i32_3 = arith.constant 0 : i32
    %6 = tpu.memref_slice %arg10[%c0_i32_0, %c0_i32_3] : memref<8x32xf32, #tpu.memory_space<vmem>> -> memref<1x32xf32, #tpu.memory_space<vmem>>
    %7 = tpu.memref_squeeze %6 : memref<1x32xf32, #tpu.memory_space<vmem>> -> memref<32xf32, #tpu.memory_space<vmem>>
    %8 = tpu.memref_slice %arg11[%c0_i32_1] : memref<8x!tpu.dma_semaphore, #tpu.memory_space<semaphore_mem>> -> memref<1x!tpu.dma_semaphore, #tpu.memory_space<semaphore_mem>>
    %9 = tpu.memref_squeeze %8 : memref<1x!tpu.dma_semaphore, #tpu.memory_space<semaphore_mem>> -> memref<!tpu.dma_semaphore, #tpu.memory_space<semaphore_mem>>
    tpu.enqueue_dma source(%5 : memref<32xf32, #tpu.memory_space<any>>) target(%7 : memref<32xf32, #tpu.memory_space<vmem>>) target_semaphore(%9 : memref<!tpu.dma_semaphore, #tpu.memory_space<semaphore_mem>>)
    %c1_i32 = arith.constant 1 : i32
    %10 = arith.addi %0, %c1_i32 : i32
    %11 = arith.index_cast %10 : i32 to index
    %12 = memref.load %arg1[%11] : memref<16xi32, #tpu.memory_space<smem>>
    %c1_i32_4 = arith.constant 1 : i32
    %c1_i32_5 = arith.constant 1 : i32
    %c0_i32_6 = arith.constant 0 : i32
    %13 = tpu.memref_slice %arg4[%12, %c0_i32_6] : memref<128x32xf32, #tpu.memory_space<any>> -> memref<1x32xf32, #tpu.memory_space<any>>
    %14 = tpu.memref_squeeze %13 : memref<1x32xf32, #tpu.memory_space<any>> -> memref<32xf32, #tpu.memory_space<any>>
    %c0_i32_7 = arith.constant 0 : i32
    %15 = tpu.memref_slice %arg10[%c1_i32_4, %c0_i32_7] : memref<8x32xf32, #tpu.memory_space<vmem>> -> memref<1x32xf32, #tpu.memory_space<vmem>>
    %16 = tpu.memref_squeeze %15 : memref<1x32xf32, #tpu.memory_space<vmem>> -> memref<32xf32, #tpu.memory_space<vmem>>
    %17 = tpu.memref_slice %arg11[%c1_i32_5] : memref<8x!tpu.dma_semaphore, #tpu.memory_space<semaphore_mem>> -> memref<1x!tpu.dma_semaphore, #tpu.memory_space<semaphore_mem>>
    %18 = tpu.memref_squeeze %17 : memref<1x!tpu.dma_semaphore, #tpu.memory_space<semaphore_mem>> -> memref<!tpu.dma_semaphore, #tpu.memory_space<semaphore_mem>>
    tpu.enqueue_dma source(%14 : memref<32xf32, #tpu.memory_space<any>>) target(%16 : memref<32xf32, #tpu.memory_space<vmem>>) target_semaphore(%18 : memref<!tpu.dma_semaphore, #tpu.memory_space<semaphore_mem>>)
    %c2_i32 = arith.constant 2 : i32
    %19 = arith.addi %0, %c2_i32 : i32
    %20 = arith.index_cast %19 : i32 to index
    %21 = memref.load %arg1[%20] : memref<16xi32, #tpu.memory_space<smem>>
    %c2_i32_8 = arith.constant 2 : i32
    %c2_i32_9 = arith.constant 2 : i32
    %c0_i32_10 = arith.constant 0 : i32
    %22 = tpu.memref_slice %arg4[%21, %c0_i32_10] : memref<128x32xf32, #tpu.memory_space<any>> -> memref<1x32xf32, #tpu.memory_space<any>>
    %23 = tpu.memref_squeeze %22 : memref<1x32xf32, #tpu.memory_space<any>> -> memref<32xf32, #tpu.memory_space<any>>
    %c0_i32_11 = arith.constant 0 : i32
    %24 = tpu.memref_slice %arg10[%c2_i32_8, %c0_i32_11] : memref<8x32xf32, #tpu.memory_space<vmem>> -> memref<1x32xf32, #tpu.memory_space<vmem>>
    %25 = tpu.memref_squeeze %24 : memref<1x32xf32, #tpu.memory_space<vmem>> -> memref<32xf32, #tpu.memory_space<vmem>>
    %26 = tpu.memref_slice %arg11[%c2_i32_9] : memref<8x!tpu.dma_semaphore, #tpu.memory_space<semaphore_mem>> -> memref<1x!tpu.dma_semaphore, #tpu.memory_space<semaphore_mem>>
    %27 = tpu.memref_squeeze %26 : memref<1x!tpu.dma_semaphore, #tpu.memory_space<semaphore_mem>> -> memref<!tpu.dma_semaphore, #tpu.memory_space<semaphore_mem>>
    tpu.enqueue_dma source(%23 : memref<32xf32, #tpu.memory_space<any>>) target(%25 : memref<32xf32, #tpu.memory_space<vmem>>) target_semaphore(%27 : memref<!tpu.dma_semaphore, #tpu.memory_space<semaphore_mem>>)
    %c3_i32 = arith.constant 3 : i32
    %28 = arith.addi %0, %c3_i32 : i32
    %29 = arith.index_cast %28 : i32 to index
    %30 = memref.load %arg1[%29] : memref<16xi32, #tpu.memory_space<smem>>
    %c3_i32_12 = arith.constant 3 : i32
    %c3_i32_13 = arith.constant 3 : i32
    %c0_i32_14 = arith.constant 0 : i32
    %31 = tpu.memref_slice %arg4[%30, %c0_i32_14] : memref<128x32xf32, #tpu.memory_space<any>> -> memref<1x32xf32, #tpu.memory_space<any>>
    %32 = tpu.memref_squeeze %31 : memref<1x32xf32, #tpu.memory_space<any>> -> memref<32xf32, #tpu.memory_space<any>>
    %c0_i32_15 = arith.constant 0 : i32
    %33 = tpu.memref_slice %arg10[%c3_i32_12, %c0_i32_15] : memref<8x32xf32, #tpu.memory_space<vmem>> -> memref<1x32xf32, #tpu.memory_space<vmem>>
    %34 = tpu.memref_squeeze %33 : memref<1x32xf32, #tpu.memory_space<vmem>> -> memref<32xf32, #tpu.memory_space<vmem>>
    %35 = tpu.memref_slice %arg11[%c3_i32_13] : memref<8x!tpu.dma_semaphore, #tpu.memory_space<semaphore_mem>> -> memref<1x!tpu.dma_semaphore, #tpu.memory_space<semaphore_mem>>
    %36 = tpu.memref_squeeze %35 : memref<1x!tpu.dma_semaphore, #tpu.memory_space<semaphore_mem>> -> memref<!tpu.dma_semaphore, #tpu.memory_space<semaphore_mem>>
    tpu.enqueue_dma source(%32 : memref<32xf32, #tpu.memory_space<any>>) target(%34 : memref<32xf32, #tpu.memory_space<vmem>>) target_semaphore(%36 : memref<!tpu.dma_semaphore, #tpu.memory_space<semaphore_mem>>)
    %c4_i32 = arith.constant 4 : i32
    %37 = arith.addi %0, %c4_i32 : i32
    %38 = arith.index_cast %37 : i32 to index
    %39 = memref.load %arg1[%38] : memref<16xi32, #tpu.memory_space<smem>>
    %c4_i32_16 = arith.constant 4 : i32
    %c4_i32_17 = arith.constant 4 : i32
    %c0_i32_18 = arith.constant 0 : i32
    %40 = tpu.memref_slice %arg4[%39, %c0_i32_18] : memref<128x32xf32, #tpu.memory_space<any>> -> memref<1x32xf32, #tpu.memory_space<any>>
    %41 = tpu.memref_squeeze %40 : memref<1x32xf32, #tpu.memory_space<any>> -> memref<32xf32, #tpu.memory_space<any>>
    %c0_i32_19 = arith.constant 0 : i32
    %42 = tpu.memref_slice %arg10[%c4_i32_16, %c0_i32_19] : memref<8x32xf32, #tpu.memory_space<vmem>> -> memref<1x32xf32, #tpu.memory_space<vmem>>
    %43 = tpu.memref_squeeze %42 : memref<1x32xf32, #tpu.memory_space<vmem>> -> memref<32xf32, #tpu.memory_space<vmem>>
    %44 = tpu.memref_slice %arg11[%c4_i32_17] : memref<8x!tpu.dma_semaphore, #tpu.memory_space<semaphore_mem>> -> memref<1x!tpu.dma_semaphore, #tpu.memory_space<semaphore_mem>>
    %45 = tpu.memref_squeeze %44 : memref<1x!tpu.dma_semaphore, #tpu.memory_space<semaphore_mem>> -> memref<!tpu.dma_semaphore, #tpu.memory_space<semaphore_mem>>
    tpu.enqueue_dma source(%41 : memref<32xf32, #tpu.memory_space<any>>) target(%43 : memref<32xf32, #tpu.memory_space<vmem>>) target_semaphore(%45 : memref<!tpu.dma_semaphore, #tpu.memory_space<semaphore_mem>>)
    %c5_i32 = arith.constant 5 : i32
    %46 = arith.addi %0, %c5_i32 : i32
    %47 = arith.index_cast %46 : i32 to index
    %48 = memref.load %arg1[%47] : memref<16xi32, #tpu.memory_space<smem>>
    %c5_i32_20 = arith.constant 5 : i32
    %c5_i32_21 = arith.constant 5 : i32
    %c0_i32_22 = arith.constant 0 : i32
    %49 = tpu.memref_slice %arg4[%48, %c0_i32_22] : memref<128x32xf32, #tpu.memory_space<any>> -> memref<1x32xf32, #tpu.memory_space<any>>
    %50 = tpu.memref_squeeze %49 : memref<1x32xf32, #tpu.memory_space<any>> -> memref<32xf32, #tpu.memory_space<any>>
    %c0_i32_23 = arith.constant 0 : i32
    %51 = tpu.memref_slice %arg10[%c5_i32_20, %c0_i32_23] : memref<8x32xf32, #tpu.memory_space<vmem>> -> memref<1x32xf32, #tpu.memory_space<vmem>>
    %52 = tpu.memref_squeeze %51 : memref<1x32xf32, #tpu.memory_space<vmem>> -> memref<32xf32, #tpu.memory_space<vmem>>
    %53 = tpu.memref_slice %arg11[%c5_i32_21] : memref<8x!tpu.dma_semaphore, #tpu.memory_space<semaphore_mem>> -> memref<1x!tpu.dma_semaphore, #tpu.memory_space<semaphore_mem>>
    %54 = tpu.memref_squeeze %53 : memref<1x!tpu.dma_semaphore, #tpu.memory_space<semaphore_mem>> -> memref<!tpu.dma_semaphore, #tpu.memory_space<semaphore_mem>>
    tpu.enqueue_dma source(%50 : memref<32xf32, #tpu.memory_space<any>>) target(%52 : memref<32xf32, #tpu.memory_space<vmem>>) target_semaphore(%54 : memref<!tpu.dma_semaphore, #tpu.memory_space<semaphore_mem>>)
    %c6_i32 = arith.constant 6 : i32
    %55 = arith.addi %0, %c6_i32 : i32
    %56 = arith.index_cast %55 : i32 to index
    %57 = memref.load %arg1[%56] : memref<16xi32, #tpu.memory_space<smem>>
    %c6_i32_24 = arith.constant 6 : i32
    %c6_i32_25 = arith.constant 6 : i32
    %c0_i32_26 = arith.constant 0 : i32
    %58 = tpu.memref_slice %arg4[%57, %c0_i32_26] : memref<128x32xf32, #tpu.memory_space<any>> -> memref<1x32xf32, #tpu.memory_space<any>>
    %59 = tpu.memref_squeeze %58 : memref<1x32xf32, #tpu.memory_space<any>> -> memref<32xf32, #tpu.memory_space<any>>
    %c0_i32_27 = arith.constant 0 : i32
    %60 = tpu.memref_slice %arg10[%c6_i32_24, %c0_i32_27] : memref<8x32xf32, #tpu.memory_space<vmem>> -> memref<1x32xf32, #tpu.memory_space<vmem>>
    %61 = tpu.memref_squeeze %60 : memref<1x32xf32, #tpu.memory_space<vmem>> -> memref<32xf32, #tpu.memory_space<vmem>>
    %62 = tpu.memref_slice %arg11[%c6_i32_25] : memref<8x!tpu.dma_semaphore, #tpu.memory_space<semaphore_mem>> -> memref<1x!tpu.dma_semaphore, #tpu.memory_space<semaphore_mem>>
    %63 = tpu.memref_squeeze %62 : memref<1x!tpu.dma_semaphore, #tpu.memory_space<semaphore_mem>> -> memref<!tpu.dma_semaphore, #tpu.memory_space<semaphore_mem>>
    tpu.enqueue_dma source(%59 : memref<32xf32, #tpu.memory_space<any>>) target(%61 : memref<32xf32, #tpu.memory_space<vmem>>) target_semaphore(%63 : memref<!tpu.dma_semaphore, #tpu.memory_space<semaphore_mem>>)
    %c7_i32 = arith.constant 7 : i32
    %64 = arith.addi %0, %c7_i32 : i32
    %65 = arith.index_cast %64 : i32 to index
    %66 = memref.load %arg1[%65] : memref<16xi32, #tpu.memory_space<smem>>
    %c7_i32_28 = arith.constant 7 : i32
    %c7_i32_29 = arith.constant 7 : i32
    %c0_i32_30 = arith.constant 0 : i32
    %67 = tpu.memref_slice %arg4[%66, %c0_i32_30] : memref<128x32xf32, #tpu.memory_space<any>> -> memref<1x32xf32, #tpu.memory_space<any>>
    %68 = tpu.memref_squeeze %67 : memref<1x32xf32, #tpu.memory_space<any>> -> memref<32xf32, #tpu.memory_space<any>>
    %c0_i32_31 = arith.constant 0 : i32
    %69 = tpu.memref_slice %arg10[%c7_i32_28, %c0_i32_31] : memref<8x32xf32, #tpu.memory_space<vmem>> -> memref<1x32xf32, #tpu.memory_space<vmem>>
    %70 = tpu.memref_squeeze %69 : memref<1x32xf32, #tpu.memory_space<vmem>> -> memref<32xf32, #tpu.memory_space<vmem>>
    %71 = tpu.memref_slice %arg11[%c7_i32_29] : memref<8x!tpu.dma_semaphore, #tpu.memory_space<semaphore_mem>> -> memref<1x!tpu.dma_semaphore, #tpu.memory_space<semaphore_mem>>
    %72 = tpu.memref_squeeze %71 : memref<1x!tpu.dma_semaphore, #tpu.memory_space<semaphore_mem>> -> memref<!tpu.dma_semaphore, #tpu.memory_space<semaphore_mem>>
    tpu.enqueue_dma source(%68 : memref<32xf32, #tpu.memory_space<any>>) target(%70 : memref<32xf32, #tpu.memory_space<vmem>>) target_semaphore(%72 : memref<!tpu.dma_semaphore, #tpu.memory_space<semaphore_mem>>)
    %c0 = arith.constant 0 : index
    %73 = memref.load %arg2[%c0] : memref<1xi32, #tpu.memory_space<smem>>
    %c1_i32_32 = arith.constant 1 : i32
    %c0_i32_33 = arith.constant 0 : i32
    %74 = arith.cmpi eq, %c1_i32_32, %c0_i32_33 : i32
    %c1_i32_34 = arith.constant 1 : i32
    %75 = arith.select %74, %c1_i32_34, %c1_i32_32 : i32
    %76 = arith.remsi %arg0, %75 : i32
    %c0_i32_35 = arith.constant 0 : i32
    %77 = arith.cmpi ne, %76, %c0_i32_35 : i32
    %c0_i32_36 = arith.constant 0 : i32
    %78 = arith.cmpi slt, %76, %c0_i32_36 : i32
    %c0_i32_37 = arith.constant 0 : i32
    %79 = arith.cmpi slt, %75, %c0_i32_37 : i32
    %80 = arith.xori %78, %79 : i1
    %81 = arith.andi %80, %77 : i1
    %82 = arith.addi %76, %75 : i32
    %83 = arith.select %81, %82, %76 : i32
    %c8_i32_38 = arith.constant 8 : i32
    %84 = arith.muli %83, %c8_i32_38 : i32
    %85 = arith.addi %73, %84 : i32
    %86 = arith.index_cast %85 : i32 to index
    %c0_39 = arith.constant 0 : index
    %87 = vector.load %arg6[%86, %c0_39] : memref<64x32xf32, #tpu.memory_space<vmem>>, vector<8x32xf32>
    %c0_40 = arith.constant 0 : index
    %c0_41 = arith.constant 0 : index
    %88 = vector.load %arg3[%c0_40, %c0_41] : memref<8x1xi32, #tpu.memory_space<vmem>>, vector<8x1xi32>
    %c0_42 = arith.constant 0 : index
    %c0_43 = arith.constant 0 : index
    %89 = vector.load %arg5[%c0_42, %c0_43] : memref<2x32xf32, #tpu.memory_space<vmem>>, vector<1x32xf32>
    %c0_i32_44 = arith.constant 0 : i32
    %90 = vector.broadcast %c0_i32_44 : i32 to vector<8x1xi32>
    %91 = arith.cmpi eq, %88, %90 : vector<8x1xi32>
    %cst = arith.constant 0.000000e+00 : f32
    %92 = vector.shape_cast %91 : vector<8x1xi1> to vector<8x1xi1>
    %93 = vector.broadcast %92 : vector<8x1xi1> to vector<8x32xi1>
    %94 = vector.shape_cast %89 : vector<1x32xf32> to vector<1x32xf32>
    %95 = vector.broadcast %94 : vector<1x32xf32> to vector<8x32xf32>
    %96 = vector.broadcast %cst : f32 to vector<8x32xf32>
    %97 = arith.select %93, %95, %96 : vector<8x32xi1>, vector<8x32xf32>
    %98 = arith.addf %87, %97 : vector<8x32xf32>
    %c1 = arith.constant 1 : index
    %c0_45 = arith.constant 0 : index
    %99 = vector.load %arg5[%c1, %c0_45] : memref<2x32xf32, #tpu.memory_space<vmem>>, vector<1x32xf32>
    %c1_i32_46 = arith.constant 1 : i32
    %100 = vector.broadcast %c1_i32_46 : i32 to vector<8x1xi32>
    %101 = arith.cmpi eq, %88, %100 : vector<8x1xi32>
    %cst_47 = arith.constant 0.000000e+00 : f32
    %102 = vector.shape_cast %101 : vector<8x1xi1> to vector<8x1xi1>
    %103 = vector.broadcast %102 : vector<8x1xi1> to vector<8x32xi1>
    %104 = vector.shape_cast %99 : vector<1x32xf32> to vector<1x32xf32>
    %105 = vector.broadcast %104 : vector<1x32xf32> to vector<8x32xf32>
    %106 = vector.broadcast %cst_47 : f32 to vector<8x32xf32>
    %107 = arith.select %103, %105, %106 : vector<8x32xi1>, vector<8x32xf32>
    %108 = arith.addf %98, %107 : vector<8x32xf32>
    %c0_i32_48 = arith.constant 0 : i32
    %c0_i32_49 = arith.constant 0 : i32
    %c0_i32_50 = arith.constant 0 : i32
    %109 = tpu.memref_slice %arg4[%3, %c0_i32_50] : memref<128x32xf32, #tpu.memory_space<any>> -> memref<1x32xf32, #tpu.memory_space<any>>
    %110 = tpu.memref_squeeze %109 : memref<1x32xf32, #tpu.memory_space<any>> -> memref<32xf32, #tpu.memory_space<any>>
    %c0_i32_51 = arith.constant 0 : i32
    %111 = tpu.memref_slice %arg10[%c0_i32_48, %c0_i32_51] : memref<8x32xf32, #tpu.memory_space<vmem>> -> memref<1x32xf32, #tpu.memory_space<vmem>>
    %112 = tpu.memref_squeeze %111 : memref<1x32xf32, #tpu.memory_space<vmem>> -> memref<32xf32, #tpu.memory_space<vmem>>
    %113 = tpu.memref_slice %arg11[%c0_i32_49] : memref<8x!tpu.dma_semaphore, #tpu.memory_space<semaphore_mem>> -> memref<1x!tpu.dma_semaphore, #tpu.memory_space<semaphore_mem>>
    %114 = tpu.memref_squeeze %113 : memref<1x!tpu.dma_semaphore, #tpu.memory_space<semaphore_mem>> -> memref<!tpu.dma_semaphore, #tpu.memory_space<semaphore_mem>>
    tpu.wait_dma2 semaphore(%114 : memref<!tpu.dma_semaphore, #tpu.memory_space<semaphore_mem>>) src(%110 : memref<32xf32, #tpu.memory_space<any>>) dst(%112 : memref<32xf32, #tpu.memory_space<vmem>>)
    %c1_i32_52 = arith.constant 1 : i32
    %c1_i32_53 = arith.constant 1 : i32
    %c0_i32_54 = arith.constant 0 : i32
    %115 = tpu.memref_slice %arg4[%12, %c0_i32_54] : memref<128x32xf32, #tpu.memory_space<any>> -> memref<1x32xf32, #tpu.memory_space<any>>
    %116 = tpu.memref_squeeze %115 : memref<1x32xf32, #tpu.memory_space<any>> -> memref<32xf32, #tpu.memory_space<any>>
    %c0_i32_55 = arith.constant 0 : i32
    %117 = tpu.memref_slice %arg10[%c1_i32_52, %c0_i32_55] : memref<8x32xf32, #tpu.memory_space<vmem>> -> memref<1x32xf32, #tpu.memory_space<vmem>>
    %118 = tpu.memref_squeeze %117 : memref<1x32xf32, #tpu.memory_space<vmem>> -> memref<32xf32, #tpu.memory_space<vmem>>
    %119 = tpu.memref_slice %arg11[%c1_i32_53] : memref<8x!tpu.dma_semaphore, #tpu.memory_space<semaphore_mem>> -> memref<1x!tpu.dma_semaphore, #tpu.memory_space<semaphore_mem>>
    %120 = tpu.memref_squeeze %119 : memref<1x!tpu.dma_semaphore, #tpu.memory_space<semaphore_mem>> -> memref<!tpu.dma_semaphore, #tpu.memory_space<semaphore_mem>>
    tpu.wait_dma2 semaphore(%120 : memref<!tpu.dma_semaphore, #tpu.memory_space<semaphore_mem>>) src(%116 : memref<32xf32, #tpu.memory_space<any>>) dst(%118 : memref<32xf32, #tpu.memory_space<vmem>>)
    %c2_i32_56 = arith.constant 2 : i32
    %c2_i32_57 = arith.constant 2 : i32
    %c0_i32_58 = arith.constant 0 : i32
    %121 = tpu.memref_slice %arg4[%21, %c0_i32_58] : memref<128x32xf32, #tpu.memory_space<any>> -> memref<1x32xf32, #tpu.memory_space<any>>
    %122 = tpu.memref_squeeze %121 : memref<1x32xf32, #tpu.memory_space<any>> -> memref<32xf32, #tpu.memory_space<any>>
    %c0_i32_59 = arith.constant 0 : i32
    %123 = tpu.memref_slice %arg10[%c2_i32_56, %c0_i32_59] : memref<8x32xf32, #tpu.memory_space<vmem>> -> memref<1x32xf32, #tpu.memory_space<vmem>>
    %124 = tpu.memref_squeeze %123 : memref<1x32xf32, #tpu.memory_space<vmem>> -> memref<32xf32, #tpu.memory_space<vmem>>
    %125 = tpu.memref_slice %arg11[%c2_i32_57] : memref<8x!tpu.dma_semaphore, #tpu.memory_space<semaphore_mem>> -> memref<1x!tpu.dma_semaphore, #tpu.memory_space<semaphore_mem>>
    %126 = tpu.memref_squeeze %125 : memref<1x!tpu.dma_semaphore, #tpu.memory_space<semaphore_mem>> -> memref<!tpu.dma_semaphore, #tpu.memory_space<semaphore_mem>>
    tpu.wait_dma2 semaphore(%126 : memref<!tpu.dma_semaphore, #tpu.memory_space<semaphore_mem>>) src(%122 : memref<32xf32, #tpu.memory_space<any>>) dst(%124 : memref<32xf32, #tpu.memory_space<vmem>>)
    %c3_i32_60 = arith.constant 3 : i32
    %c3_i32_61 = arith.constant 3 : i32
    %c0_i32_62 = arith.constant 0 : i32
    %127 = tpu.memref_slice %arg4[%30, %c0_i32_62] : memref<128x32xf32, #tpu.memory_space<any>> -> memref<1x32xf32, #tpu.memory_space<any>>
    %128 = tpu.memref_squeeze %127 : memref<1x32xf32, #tpu.memory_space<any>> -> memref<32xf32, #tpu.memory_space<any>>
    %c0_i32_63 = arith.constant 0 : i32
    %129 = tpu.memref_slice %arg10[%c3_i32_60, %c0_i32_63] : memref<8x32xf32, #tpu.memory_space<vmem>> -> memref<1x32xf32, #tpu.memory_space<vmem>>
    %130 = tpu.memref_squeeze %129 : memref<1x32xf32, #tpu.memory_space<vmem>> -> memref<32xf32, #tpu.memory_space<vmem>>
    %131 = tpu.memref_slice %arg11[%c3_i32_61] : memref<8x!tpu.dma_semaphore, #tpu.memory_space<semaphore_mem>> -> memref<1x!tpu.dma_semaphore, #tpu.memory_space<semaphore_mem>>
    %132 = tpu.memref_squeeze %131 : memref<1x!tpu.dma_semaphore, #tpu.memory_space<semaphore_mem>> -> memref<!tpu.dma_semaphore, #tpu.memory_space<semaphore_mem>>
    tpu.wait_dma2 semaphore(%132 : memref<!tpu.dma_semaphore, #tpu.memory_space<semaphore_mem>>) src(%128 : memref<32xf32, #tpu.memory_space<any>>) dst(%130 : memref<32xf32, #tpu.memory_space<vmem>>)
    %c4_i32_64 = arith.constant 4 : i32
    %c4_i32_65 = arith.constant 4 : i32
    %c0_i32_66 = arith.constant 0 : i32
    %133 = tpu.memref_slice %arg4[%39, %c0_i32_66] : memref<128x32xf32, #tpu.memory_space<any>> -> memref<1x32xf32, #tpu.memory_space<any>>
    %134 = tpu.memref_squeeze %133 : memref<1x32xf32, #tpu.memory_space<any>> -> memref<32xf32, #tpu.memory_space<any>>
    %c0_i32_67 = arith.constant 0 : i32
    %135 = tpu.memref_slice %arg10[%c4_i32_64, %c0_i32_67] : memref<8x32xf32, #tpu.memory_space<vmem>> -> memref<1x32xf32, #tpu.memory_space<vmem>>
    %136 = tpu.memref_squeeze %135 : memref<1x32xf32, #tpu.memory_space<vmem>> -> memref<32xf32, #tpu.memory_space<vmem>>
    %137 = tpu.memref_slice %arg11[%c4_i32_65] : memref<8x!tpu.dma_semaphore, #tpu.memory_space<semaphore_mem>> -> memref<1x!tpu.dma_semaphore, #tpu.memory_space<semaphore_mem>>
    %138 = tpu.memref_squeeze %137 : memref<1x!tpu.dma_semaphore, #tpu.memory_space<semaphore_mem>> -> memref<!tpu.dma_semaphore, #tpu.memory_space<semaphore_mem>>
    tpu.wait_dma2 semaphore(%138 : memref<!tpu.dma_semaphore, #tpu.memory_space<semaphore_mem>>) src(%134 : memref<32xf32, #tpu.memory_space<any>>) dst(%136 : memref<32xf32, #tpu.memory_space<vmem>>)
    %c5_i32_68 = arith.constant 5 : i32
    %c5_i32_69 = arith.constant 5 : i32
    %c0_i32_70 = arith.constant 0 : i32
    %139 = tpu.memref_slice %arg4[%48, %c0_i32_70] : memref<128x32xf32, #tpu.memory_space<any>> -> memref<1x32xf32, #tpu.memory_space<any>>
    %140 = tpu.memref_squeeze %139 : memref<1x32xf32, #tpu.memory_space<any>> -> memref<32xf32, #tpu.memory_space<any>>
    %c0_i32_71 = arith.constant 0 : i32
    %141 = tpu.memref_slice %arg10[%c5_i32_68, %c0_i32_71] : memref<8x32xf32, #tpu.memory_space<vmem>> -> memref<1x32xf32, #tpu.memory_space<vmem>>
    %142 = tpu.memref_squeeze %141 : memref<1x32xf32, #tpu.memory_space<vmem>> -> memref<32xf32, #tpu.memory_space<vmem>>
    %143 = tpu.memref_slice %arg11[%c5_i32_69] : memref<8x!tpu.dma_semaphore, #tpu.memory_space<semaphore_mem>> -> memref<1x!tpu.dma_semaphore, #tpu.memory_space<semaphore_mem>>
    %144 = tpu.memref_squeeze %143 : memref<1x!tpu.dma_semaphore, #tpu.memory_space<semaphore_mem>> -> memref<!tpu.dma_semaphore, #tpu.memory_space<semaphore_mem>>
    tpu.wait_dma2 semaphore(%144 : memref<!tpu.dma_semaphore, #tpu.memory_space<semaphore_mem>>) src(%140 : memref<32xf32, #tpu.memory_space<any>>) dst(%142 : memref<32xf32, #tpu.memory_space<vmem>>)
    %c6_i32_72 = arith.constant 6 : i32
    %c6_i32_73 = arith.constant 6 : i32
    %c0_i32_74 = arith.constant 0 : i32
    %145 = tpu.memref_slice %arg4[%57, %c0_i32_74] : memref<128x32xf32, #tpu.memory_space<any>> -> memref<1x32xf32, #tpu.memory_space<any>>
    %146 = tpu.memref_squeeze %145 : memref<1x32xf32, #tpu.memory_space<any>> -> memref<32xf32, #tpu.memory_space<any>>
    %c0_i32_75 = arith.constant 0 : i32
    %147 = tpu.memref_slice %arg10[%c6_i32_72, %c0_i32_75] : memref<8x32xf32, #tpu.memory_space<vmem>> -> memref<1x32xf32, #tpu.memory_space<vmem>>
    %148 = tpu.memref_squeeze %147 : memref<1x32xf32, #tpu.memory_space<vmem>> -> memref<32xf32, #tpu.memory_space<vmem>>
    %149 = tpu.memref_slice %arg11[%c6_i32_73] : memref<8x!tpu.dma_semaphore, #tpu.memory_space<semaphore_mem>> -> memref<1x!tpu.dma_semaphore, #tpu.memory_space<semaphore_mem>>
    %150 = tpu.memref_squeeze %149 : memref<1x!tpu.dma_semaphore, #tpu.memory_space<semaphore_mem>> -> memref<!tpu.dma_semaphore, #tpu.memory_space<semaphore_mem>>
    tpu.wait_dma2 semaphore(%150 : memref<!tpu.dma_semaphore, #tpu.memory_space<semaphore_mem>>) src(%146 : memref<32xf32, #tpu.memory_space<any>>) dst(%148 : memref<32xf32, #tpu.memory_space<vmem>>)
    %c7_i32_76 = arith.constant 7 : i32
    %c7_i32_77 = arith.constant 7 : i32
    %c0_i32_78 = arith.constant 0 : i32
    %151 = tpu.memref_slice %arg4[%66, %c0_i32_78] : memref<128x32xf32, #tpu.memory_space<any>> -> memref<1x32xf32, #tpu.memory_space<any>>
    %152 = tpu.memref_squeeze %151 : memref<1x32xf32, #tpu.memory_space<any>> -> memref<32xf32, #tpu.memory_space<any>>
    %c0_i32_79 = arith.constant 0 : i32
    %153 = tpu.memref_slice %arg10[%c7_i32_76, %c0_i32_79] : memref<8x32xf32, #tpu.memory_space<vmem>> -> memref<1x32xf32, #tpu.memory_space<vmem>>
    %154 = tpu.memref_squeeze %153 : memref<1x32xf32, #tpu.memory_space<vmem>> -> memref<32xf32, #tpu.memory_space<vmem>>
    %155 = tpu.memref_slice %arg11[%c7_i32_77] : memref<8x!tpu.dma_semaphore, #tpu.memory_space<semaphore_mem>> -> memref<1x!tpu.dma_semaphore, #tpu.memory_space<semaphore_mem>>
    %156 = tpu.memref_squeeze %155 : memref<1x!tpu.dma_semaphore, #tpu.memory_space<semaphore_mem>> -> memref<!tpu.dma_semaphore, #tpu.memory_space<semaphore_mem>>
    tpu.wait_dma2 semaphore(%156 : memref<!tpu.dma_semaphore, #tpu.memory_space<semaphore_mem>>) src(%152 : memref<32xf32, #tpu.memory_space<any>>) dst(%154 : memref<32xf32, #tpu.memory_space<vmem>>)
    %c0_80 = arith.constant 0 : index
    %c0_81 = arith.constant 0 : index
    %157 = vector.load %arg10[%c0_80, %c0_81] : memref<8x32xf32, #tpu.memory_space<vmem>>, vector<8x32xf32>
    %158 = arith.addf %108, %157 : vector<8x32xf32>
    %cst_82 = arith.constant dense<0.000000e+00> : vector<8xf32>
    %159 = vector.multi_reduction <add>, %158, %cst_82 [1] : vector<8x32xf32> to vector<8xf32>
    %160 = vector.shape_cast %159 : vector<8xf32> to vector<8x1xf32>
    %cst_83 = arith.constant 3.200000e+01 : f32
    %161 = vector.broadcast %cst_83 : f32 to vector<8x1xf32>
    %162 = arith.divf %160, %161 : vector<8x1xf32>
    %163 = vector.broadcast %162 : vector<8x1xf32> to vector<8x32xf32>
    %164 = arith.subf %158, %163 : vector<8x32xf32>
    %165 = arith.mulf %164, %164 : vector<8x32xf32>
    %cst_84 = arith.constant dense<0.000000e+00> : vector<8xf32>
    %166 = vector.multi_reduction <add>, %165, %cst_84 [1] : vector<8x32xf32> to vector<8xf32>
    %167 = vector.shape_cast %166 : vector<8xf32> to vector<8x1xf32>
    %cst_85 = arith.constant 3.200000e+01 : f32
    %168 = vector.broadcast %cst_85 : f32 to vector<8x1xf32>
    %169 = arith.divf %167, %168 : vector<8x1xf32>
    %170 = vector.broadcast %162 : vector<8x1xf32> to vector<8x32xf32>
    %171 = arith.subf %158, %170 : vector<8x32xf32>
    %cst_86 = arith.constant 9.99999996E-13 : f32
    %172 = vector.broadcast %cst_86 : f32 to vector<8x1xf32>
    %173 = arith.addf %169, %172 : vector<8x1xf32>
    %174 = math.rsqrt %173 : vector<8x1xf32>
    %175 = vector.broadcast %174 : vector<8x1xf32> to vector<8x32xf32>
    %176 = arith.mulf %171, %175 : vector<8x32xf32>
    %c0_87 = arith.constant 0 : index
    %c0_88 = arith.constant 0 : index
    %177 = vector.load %arg7[%c0_87, %c0_88] : memref<1x32xf32, #tpu.memory_space<vmem>>, vector<1x32xf32>
    %178 = vector.broadcast %177 : vector<1x32xf32> to vector<8x32xf32>
    %179 = arith.mulf %176, %178 : vector<8x32xf32>
    %c0_89 = arith.constant 0 : index
    %c0_90 = arith.constant 0 : index
    %180 = vector.load %arg8[%c0_89, %c0_90] : memref<1x32xf32, #tpu.memory_space<vmem>>, vector<1x32xf32>
    %181 = vector.broadcast %180 : vector<1x32xf32> to vector<8x32xf32>
    %182 = arith.addf %179, %181 : vector<8x32xf32>
    %c0_91 = arith.constant 0 : index
    %c0_92 = arith.constant 0 : index
    %183 = vector.load %arg9[%c0_91, %c0_92] : memref<8x32xf32, #tpu.memory_space<vmem>>, vector<8x32xf32>
    tpu.vector_store %arg9[%c0_91, %c0_92], %182 {strides = array<i32>} : memref<8x32xf32, #tpu.memory_space<vmem>>, vector<8x32xf32>,
    return
  }
  func.func @transform_0(%arg0: i32, %arg1: memref<16xi32, #tpu.memory_space<smem>>, %arg2: memref<1xi32, #tpu.memory_space<smem>>) -> (i32, i32) {
    %c0_i32 = arith.constant 0 : i32
    %c0_i32_0 = arith.constant 0 : i32
    return %arg0, %c0_i32 : i32, i32
  }
  func.func @transform_2(%arg0: i32, %arg1: memref<16xi32, #tpu.memory_space<smem>>, %arg2: memref<1xi32, #tpu.memory_space<smem>>) -> (i32, i32) {
    %c0_i32 = arith.constant 0 : i32
    %c0_i32_0 = arith.constant 0 : i32
    %c0_i32_1 = arith.constant 0 : i32
    return %c0_i32, %c0_i32_0 : i32, i32
  }
  func.func @transform_3(%arg0: i32, %arg1: memref<16xi32, #tpu.memory_space<smem>>, %arg2: memref<1xi32, #tpu.memory_space<smem>>) -> (i32, i32) {
    %c0_i32 = arith.constant 0 : i32
    %c0_i32_0 = arith.constant 0 : i32
    %c0_i32_1 = arith.constant 0 : i32
    return %c0_i32, %c0_i32_0 : i32, i32
  }
  func.func @transform_4(%arg0: i32, %arg1: memref<16xi32, #tpu.memory_space<smem>>, %arg2: memref<1xi32, #tpu.memory_space<smem>>) -> (i32, i32) {
    %c0_i32 = arith.constant 0 : i32
    %c0_i32_0 = arith.constant 0 : i32
    %c0_i32_1 = arith.constant 0 : i32
    return %c0_i32, %c0_i32_0 : i32, i32
  }
  func.func @transform_5(%arg0: i32, %arg1: memref<16xi32, #tpu.memory_space<smem>>, %arg2: memref<1xi32, #tpu.memory_space<smem>>) -> (i32, i32) {
    %c0_i32 = arith.constant 0 : i32
    %c0_i32_0 = arith.constant 0 : i32
    %c0_i32_1 = arith.constant 0 : i32
    return %c0_i32, %c0_i32_0 : i32, i32
  }
  func.func @transform_6(%arg0: i32, %arg1: memref<16xi32, #tpu.memory_space<smem>>, %arg2: memref<1xi32, #tpu.memory_space<smem>>) -> (i32, i32) {
    %c0_i32 = arith.constant 0 : i32
    %c0_i32_0 = arith.constant 0 : i32
    return %arg0, %c0_i32 : i32, i32
  }
}

</mosaic_0001>

<llo_original>
// kernel: tpu_custom_call.1
$region0: #{tpu_custom_call.1}
  #allocation0 [shape = 'u32[]', space=smem, size = 0x4, offset = 0x4, fixed_abs, tag = 'smem constant byte address 0x4 - core index']
  #allocation1 [shape = 'u32[144,128]{1,0:T(1,128)}', space=vmem, size = 0x12000, scoped, tag = 'internal scratch']
  #allocation2 [shape = 'f32[8,32]{1,0:T(8,128)}', space=vmem, size = 0x1000, scoped, tag = 'scratch operand']
  #allocation3 [shape = 's32[8]{0}', space=sflag, size = 0x20, scoped, tag = 'scratch operand']
  #allocation4 [shape = 's32[1]{0}', space=sflag, size = 0x4, scoped, tag = 'scoped memory for tpu_custom_call.1']
  #allocation5 [shape = 'u8[512]{0}', space=smem, size = 0x200, scoped, tag = 'prefetched SMEM operand 0']
  #allocation6 [shape = 's32[1]{0:T(128)S(6)}', space=smem, size = 0x200, scoped, tag = 'prefetched SMEM operand 1']
  #allocation9 [shape = 's32[]', space=sflag, size = 0x4, offset = 0, fixed_abs, tag = 'sflag constant byte address 0x0 - dummy sync flag']
  #allocation10 [shape = 's32[]', space=sflag, size = 0x4, offset = 0, fixed_abs, tag = 'sflag constant byte address 0x0 - dummy sync flag']
  #allocation11 [shape = 's32[]', space=sflag, size = 0x4, offset = 0, fixed_abs, tag = 'sflag constant byte address 0x0 - dummy sync flag']
  #allocation12 [shape = 's32[]', space=sflag, size = 0x4, offset = 0, fixed_abs, tag = 'sflag constant byte address 0x0 - dummy sync flag']
  #allocation13 [shape = 's32[]', space=sflag, size = 0x4, offset = 0, fixed_abs, tag = 'sflag constant byte address 0x0 - dummy sync flag']
  #allocation14 [shape = 's32[]', space=sflag, size = 0x4, offset = 0, fixed_abs, tag = 'sflag constant byte address 0x0 - dummy sync flag']
  #allocation15 [shape = 's32[]', space=sflag, size = 0x4, offset = 0, fixed_abs, tag = 'sflag constant byte address 0x0 - dummy sync flag']
  #allocation16 [shape = 's32[]', space=sflag, size = 0x4, offset = 0, fixed_abs, tag = 'sflag constant byte address 0x0 - dummy sync flag']
  %s0 = inlined_call_operand.vmem [shape: s32[16], index: 0, kind: input, shape index: {}]
  %s1 = inlined_call_operand.<no memory space> [shape: s32[1], index: 1, kind: input, shape index: {}]
  %s2 = inlined_call_operand.vmem [shape: s32[16,1], index: 2, kind: input, shape index: {}]
  %s3 = inlined_call_operand.vmem [shape: f32[128,32], index: 3, kind: input, shape index: {}]
  %s4 = inlined_call_operand.vmem [shape: f32[2,32], index: 4, kind: input, shape index: {}]
  %s5 = inlined_call_operand.vmem [shape: f32[64,32], index: 5, kind: input, shape index: {}]
  %s6 = inlined_call_operand.vmem [shape: f32[1,32], index: 6, kind: input, shape index: {}]
  %s7 = inlined_call_operand.vmem [shape: f32[1,32], index: 7, kind: input, shape index: {}]
  %s8 = inlined_call_operand.hbm [shape: f32[16,32], index: 8, kind: output, shape index: {}]
  %s9 = sld [smem:[#allocation0]]
  $region293: #{tpu_custom_call.1} parent=0
    _
  %s11 = ssub.s32 1, %s9
  %s12 = scalar_select 0, %s11, %s9
  %s13 = sshll.u32 %s0, 4
  %s14 = int_to_ptr.vmem [resolvable:$true] %s13
  %16 = dma.vmem_to_smem %s14, 16, [#allocation5], [#allocation4]
  %17 = sst [smem:[#allocation6]] %s1
  %18 = dma.done [#allocation4], 16
  %19 = sfence
  $region1: #{tpu_custom_call.1} parent=0
    #allocation7 [shape = 'u8[8192]{0}', space=vmem, size = 0x2000, scoped, tag = 'output window, operand 0']
    #allocation8 [shape = 's32[2]{0}', space=sflag, size = 0x8, scoped, tag = 'scoped memory for tpu_custom_call.1']
    %20 = vsyncpa [#allocation8], 0
    %s21 = scalar_lea.sflag [#allocation8], 1
    %22 = vsyncpa %s21, 0
    loop: start=0, step=1, limit=4
    $region2: #{tpu_custom_call.1} parent=1 // loop_pre_header
      _
    $region3: #{tpu_custom_call.1} parent=1 // loop_header
      %s24 = sphi 0, %s28
      %p25 = scmp.ge.s32.totalorder %s24, 4
      %s34 = sphi 0, %s36
      %s37 = sphi 0, %s34
      %s38 = sphi 0, %s37
      %s54 = sphi 0, %s38
      %s58 = sphi 0, %s58
      %s60 = sphi 0, %s58
      %s61 = sphi 0, %s60
      %s75 = sphi 0, %s61
      %s79 = sphi 0, %s79
      %s81 = sphi 0, %s79
      %s82 = sphi 0, %s81
      %s96 = sphi 0, %s82
      %s100 = sphi 0, %s100
      %s102 = sphi 0, %s100
      %s103 = sphi 0, %s102
      %s117 = sphi 0, %s103
      %s121 = sphi 0, %s121
      %s123 = sphi 0, %s121
      %s124 = sphi 0, %s123
      %s138 = sphi 0, %s124
      %s144 = sphi 0, %s146
      %s147 = sphi 0, %s144
      %s148 = sphi 0, %s147
      %s164 = sphi 0, %s148
    $region4: #{tpu_custom_call.1} parent=1 // loop_header_branch
      %27 = sbr.rel (%p25) target = $region8
    $region5: #{tpu_custom_call.1} parent=1 // loop_body
      %s29 = ssub.s32 %s24, 1
      %s30 = ssub.s32 %s24, 2
      %s31 = sadd.s32 %s24, 1
      %s32 = ssub.s32 %s24, %s31
      %p33 = scmp.eq.s32.totalorder %s32, 0
      %s35 = sadd.s32 %s34, 1
      %s36 = scalar_select %p33, %s34, %s35
      %p39 = pneg %p33
      %p40 = scmp.eq.s32.totalorder %s24, 1
      %p41 = por %p39, %p40
      %p42 = scmp.ne.s32.totalorder %s34, %s37
      %p43 = scmp.eq.s32.totalorder %s24, 0
      %p44 = por %p42, %p43
      %p45 = scmp.ne.s32.totalorder %s34, %s37
      %p46 = scmp.eq.s32.totalorder %s29, 1
      %p47 = por %p45, %p46
      %p48 = scmp.ne.s32.totalorder %s37, %s38
      %p49 = scmp.eq.s32.totalorder %s29, 0
      %p50 = por %p48, %p49
      %p51 = scmp.ne.s32.totalorder %s37, %s38
      %p52 = scmp.eq.s32.totalorder %s30, 1
      %p53 = por %p51, %p52
      %p55 = scmp.ne.s32.totalorder %s38, %s54
      %p56 = scmp.eq.s32.totalorder %s30, 0
      %p57 = por %p55, %p56
      %s59 = sadd.s32 %s58, 1
      %p62 = scmp.eq.s32.totalorder %s24, 1
      %p63 = scmp.ne.s32.totalorder %s58, %s60
      %p64 = scmp.eq.s32.totalorder %s24, 0
      %p65 = por %p63, %p64
      %p66 = scmp.ne.s32.totalorder %s58, %s60
      %p67 = scmp.eq.s32.totalorder %s29, 1
      %p68 = por %p66, %p67
      %p69 = scmp.ne.s32.totalorder %s60, %s61
      %p70 = scmp.eq.s32.totalorder %s29, 0
      %p71 = por %p69, %p70
      %p72 = scmp.ne.s32.totalorder %s60, %s61
      %p73 = scmp.eq.s32.totalorder %s30, 1
      %p74 = por %p72, %p73
      %p76 = scmp.ne.s32.totalorder %s61, %s75
      %p77 = scmp.eq.s32.totalorder %s30, 0
      %p78 = por %p76, %p77
      %s80 = sadd.s32 %s79, 1
      %p83 = scmp.eq.s32.totalorder %s24, 1
      %p84 = scmp.ne.s32.totalorder %s79, %s81
      %p85 = scmp.eq.s32.totalorder %s24, 0
      %p86 = por %p84, %p85
      %p87 = scmp.ne.s32.totalorder %s79, %s81
      %p88 = scmp.eq.s32.totalorder %s29, 1
      %p89 = por %p87, %p88
      %p90 = scmp.ne.s32.totalorder %s81, %s82
      %p91 = scmp.eq.s32.totalorder %s29, 0
      %p92 = por %p90, %p91
      %p93 = scmp.ne.s32.totalorder %s81, %s82
      %p94 = scmp.eq.s32.totalorder %s30, 1
      %p95 = por %p93, %p94
      %p97 = scmp.ne.s32.totalorder %s82, %s96
      %p98 = scmp.eq.s32.totalorder %s30, 0
      %p99 = por %p97, %p98
      %s101 = sadd.s32 %s100, 1
      %p104 = scmp.eq.s32.totalorder %s24, 1
      %p105 = scmp.ne.s32.totalorder %s100, %s102
      %p106 = scmp.eq.s32.totalorder %s24, 0
      %p107 = por %p105, %p106
      %p108 = scmp.ne.s32.totalorder %s100, %s102
      %p109 = scmp.eq.s32.totalorder %s29, 1
      %p110 = por %p108, %p109
      %p111 = scmp.ne.s32.totalorder %s102, %s103
      %p112 = scmp.eq.s32.totalorder %s29, 0
      %p113 = por %p111, %p112
      %p114 = scmp.ne.s32.totalorder %s102, %s103
      %p115 = scmp.eq.s32.totalorder %s30, 1
      %p116 = por %p114, %p115
      %p118 = scmp.ne.s32.totalorder %s103, %s117
      %p119 = scmp.eq.s32.totalorder %s30, 0
      %p120 = por %p118, %p119
      %s122 = sadd.s32 %s121, 1
      %p125 = scmp.eq.s32.totalorder %s24, 1
      %p126 = scmp.ne.s32.totalorder %s121, %s123
      %p127 = scmp.eq.s32.totalorder %s24, 0
      %p128 = por %p126, %p127
      %p129 = scmp.ne.s32.totalorder %s121, %s123
      %p130 = scmp.eq.s32.totalorder %s29, 1
      %p131 = por %p129, %p130
      %p132 = scmp.ne.s32.totalorder %s123, %s124
      %p133 = scmp.eq.s32.totalorder %s29, 0
      %p134 = por %p132, %p133
      %p135 = scmp.ne.s32.totalorder %s123, %s124
      %p136 = scmp.eq.s32.totalorder %s30, 1
      %p137 = por %p135, %p136
      %p139 = scmp.ne.s32.totalorder %s124, %s138
      %p140 = scmp.eq.s32.totalorder %s30, 0
      %p141 = por %p139, %p140
      %s142 = ssub.s32 %s24, %s31
      %p143 = scmp.eq.s32.totalorder %s142, 0
      %s145 = sadd.s32 %s144, 1
      %s146 = scalar_select %p143, %s144, %s145
      %p149 = pneg %p143
      %p150 = scmp.eq.s32.totalorder %s24, 1
      %p151 = por %p149, %p150
      %p152 = scmp.ne.s32.totalorder %s144, %s147
      %p153 = scmp.eq.s32.totalorder %s24, 0
      %p154 = por %p152, %p153
      %p155 = scmp.ne.s32.totalorder %s144, %s147
      %p156 = scmp.eq.s32.totalorder %s29, 1
      %p157 = por %p155, %p156
      %p158 = scmp.ne.s32.totalorder %s147, %s148
      %p159 = scmp.eq.s32.totalorder %s29, 0
      %p160 = por %p158, %p159
      %p161 = scmp.ne.s32.totalorder %s147, %s148
      %p162 = scmp.eq.s32.totalorder %s30, 1
      %p163 = por %p161, %p162
      %p165 = scmp.ne.s32.totalorder %s148, %s164
      %p166 = scmp.eq.s32.totalorder %s30, 0
      %p167 = por %p165, %p166
      %p168 = scmp.le.s32.totalorder 1, %s24
      %p169 = scmp.lt.s32.totalorder %s24, 3
      %p170 = pnand %p168, %p169
      %p171 = pneg %p170
      // Predicated region
      $region9: #{tpu_custom_call.1} parent=5 // pred_check
        _
      $region10: #{tpu_custom_call.1} parent=5 // pred_check_branch
        %173 = sbr.rel (%p170) target = $region12
      $region11: #{tpu_custom_call.1} parent=5 // pred_region
        %s174 = ssub.s32 %s24, 1
        // Predicated region
        $region13: #{tpu_custom_call.1} parent=11 // pred_check
          %p175 = pneg %p71
        $region14: #{tpu_custom_call.1} parent=11 // pred_check_branch
          %177 = sbr.rel (%p175) target = $region16
        $region15: #{tpu_custom_call.1} parent=11 // pred_region
          _
        $region16: #{tpu_custom_call.1} parent=11 // pred_fallthru
          _
        // Predicated region
        $region17: #{tpu_custom_call.1} parent=11 // pred_check
          %p178 = pneg %p92
        $region18: #{tpu_custom_call.1} parent=11 // pred_check_branch
          %180 = sbr.rel (%p178) target = $region20
        $region19: #{tpu_custom_call.1} parent=11 // pred_region
          _
        $region20: #{tpu_custom_call.1} parent=11 // pred_fallthru
          _
        // Predicated region
        $region21: #{tpu_custom_call.1} parent=11 // pred_check
          %p181 = pneg %p113
        $region22: #{tpu_custom_call.1} parent=11 // pred_check_branch
          %183 = sbr.rel (%p181) target = $region24
        $region23: #{tpu_custom_call.1} parent=11 // pred_region
          _
        $region24: #{tpu_custom_call.1} parent=11 // pred_fallthru
          _
        // Predicated region
        $region25: #{tpu_custom_call.1} parent=11 // pred_check
          %p184 = pneg %p134
        $region26: #{tpu_custom_call.1} parent=11 // pred_check_branch
          %186 = sbr.rel (%p184) target = $region28
        $region27: #{tpu_custom_call.1} parent=11 // pred_region
          _
        $region28: #{tpu_custom_call.1} parent=11 // pred_fallthru
          _
      $region12: #{tpu_custom_call.1} parent=5 // pred_fallthru
        _
      %p187 = scmp.lt.s32.totalorder %s24, 2
      // Predicated region
      $region29: #{tpu_custom_call.1} parent=5 // pred_check
        %p188 = pneg %p187
      $region30: #{tpu_custom_call.1} parent=5 // pred_check_branch
        %190 = sbr.rel (%p188) target = $region32
      $region31: #{tpu_custom_call.1} parent=5 // pred_region
        // Predicated region
        $region33: #{tpu_custom_call.1} parent=31 // pred_check
          %p191 = pneg %p44
        $region34: #{tpu_custom_call.1} parent=31 // pred_check_branch
          %193 = sbr.rel (%p191) target = $region36
        $region35: #{tpu_custom_call.1} parent=31 // pred_region
          %p194 = scmp.lt.s32.totalorder %s24, 1
          %s195 = scalar_select %p194, %s24, 1
          %s196 = smul.addr %s195, 8
          %s197 = scalar_lea.vmem %s2, %s196
        $region36: #{tpu_custom_call.1} parent=31 // pred_fallthru
          _
      $region32: #{tpu_custom_call.1} parent=5 // pred_fallthru
        _
      %p198 = scmp.le.s32.totalorder 1, %s24
      %p199 = scmp.lt.s32.totalorder %s24, 3
      %p200 = pnand %p198, %p199
      %p201 = pneg %p200
      // Predicated region
      $region37: #{tpu_custom_call.1} parent=5 // pred_check
        _
      $region38: #{tpu_custom_call.1} parent=5 // pred_check_branch
        %203 = sbr.rel (%p200) target = $region40
      $region39: #{tpu_custom_call.1} parent=5 // pred_region
        %s204 = ssub.s32 %s24, 1
        %p205 = scmp.lt.s32.totalorder %s29, 1
        %s206 = scalar_select %p205, %s29, 1
        %s207 = smul.addr %s206, 8
        %s208 = scalar_lea.vmem %s2, %s207
        %p209 = pneg %p50
        %p210 = pneg %p47
        %p211 = pneg %p71
        %p212 = pneg %p68
        %p213 = pneg %p92
        %p214 = pneg %p89
        %p215 = pneg %p113
        %p216 = pneg %p110
        %p217 = pneg %p134
        %p218 = pneg %p131
        %p219 = pneg %p160
        %p220 = pneg %p157
        %s221 = sand.u32 %s147, 1
        %s222 = scalar_lea.sflag [#allocation8], %s221
        %s223 = sand.u32 %s147, 1
        %s224 = smul.addr %s223, 8
        %s225 = scalar_lea.vmem [#allocation7], %s224
        %p226 = scmp.lt.s32.totalorder %s29, 1
        %s227 = scalar_select %p226, %s29, 1
        %s228 = smul.addr %s227, 8
        %s229 = scalar_lea.vmem %s2, %s228
        %s230 = smul.u32 %s29, 8
        %s231 = sld [smem:[#allocation5 + %s230]]
        %s232 = scalar_lea.vmem %s3, %s231
        %p234 = scmp.lt.u32.totalorder 1, 8
        %p235 = pneg %p234
        // Predicated region
        $region41: #{tpu_custom_call.1} parent=39 // pred_check
          _
        $region42: #{tpu_custom_call.1} parent=39 // pred_check_branch
          %237 = sbr.rel (%p234) target = $region44
        $region43: #{tpu_custom_call.1} parent=39 // pred_region
          %s252 = sand.u32 1, 7
          %p253 = scmp.eq.s32.totalorder %s252, 0
          %p254 = pneg %p253
          // Predicated region
          $region56: #{tpu_custom_call.1} parent=43 // pred_check
            _
          $region57: #{tpu_custom_call.1} parent=43 // pred_check_branch
            %256 = sbr.rel (%p253) target = $region59
          $region58: #{tpu_custom_call.1} parent=43 // pred_region
            %s257 = sand.u32 1, 7
            %s258 = ssub.s32 1, %s257
            %s259 = scalar_lea.vmem %s232, %s258
            %s260 = ssub.s32 1, %s257
            %s261 = scalar_lea.vmem [#allocation2], %s260
            %s262 = sshllo.u32 0, %s257
            loop: start=0, step=1, limit=1
            $region60: #{tpu_custom_call.1} parent=58 // loop_pre_header
              _
            $region61: #{tpu_custom_call.1} parent=58 // loop_header
              %s264 = sphi 0, %s268
              %p265 = scmp.ge.s32.totalorder %s264, 1
              %s269 = sphi %s259, %s259
              %s270 = sphi %s261, %s261
            $region62: #{tpu_custom_call.1} parent=58 // loop_header_branch
              %267 = sbr.rel (%p265) target = $region66
            $region63: #{tpu_custom_call.1} parent=58 // loop_body
              %v271 = vld [vmem:[%s269] sm:%s262]
              %272 = vst [vmem:[%s270] sm:%s262] %v271
            $region64: #{tpu_custom_call.1} parent=58 // loop_footer
              %s268 = sadd.s32 1, %s264
            $region65: #{tpu_custom_call.1} parent=58 // loop_footer_branch
              %263 = sbr.rel target = $region61
            $region66: #{tpu_custom_call.1} parent=58 // loop_exit
              _
          $region59: #{tpu_custom_call.1} parent=43 // pred_fallthru
            _
        $region44: #{tpu_custom_call.1} parent=39 // pred_fallthru
          _
        // Predicated region
        $region45: #{tpu_custom_call.1} parent=39 // pred_check
          %p238 = pneg %p234
        $region46: #{tpu_custom_call.1} parent=39 // pred_check_branch
          %240 = sbr.rel (%p238) target = $region48
        $region47: #{tpu_custom_call.1} parent=39 // pred_region
          %s241 = sshllo.u32 0, 1
          loop: start=0, step=1, limit=1
          $region49: #{tpu_custom_call.1} parent=47 // loop_pre_header
            _
          $region50: #{tpu_custom_call.1} parent=47 // loop_header
            %s243 = sphi 0, %s247
            %p244 = scmp.ge.s32.totalorder %s243, 1
            %s248 = sphi %s232, %s232
            %s249 = sphi [#allocation2], [#allocation2]
          $region51: #{tpu_custom_call.1} parent=47 // loop_header_branch
            %246 = sbr.rel (%p244) target = $region55
          $region52: #{tpu_custom_call.1} parent=47 // loop_body
            %v250 = vld [vmem:[%s248] sm:%s241]
            %251 = vst [vmem:[%s249] sm:%s241] %v250
          $region53: #{tpu_custom_call.1} parent=47 // loop_footer
            %s247 = sadd.s32 1, %s243
          $region54: #{tpu_custom_call.1} parent=47 // loop_footer_branch
            %242 = sbr.rel target = $region50
          $region55: #{tpu_custom_call.1} parent=47 // loop_exit
            _
        $region48: #{tpu_custom_call.1} parent=39 // pred_fallthru
          _
        // Predicated region
        $region67: #{tpu_custom_call.1} parent=39 // pred_check
          _
        $region68: #{tpu_custom_call.1} parent=39 // pred_check_branch
          %275 = sbr.rel (0) target = $region70
        $region69: #{tpu_custom_call.1} parent=39 // pred_region
          %276 = vsyncadd [#allocation3], 16
        $region70: #{tpu_custom_call.1} parent=39 // pred_fallthru
          _
        %s277 = sadd.s32 %s230, 1
        %s278 = sld [smem:[#allocation5 + %s277]]
        %s279 = scalar_lea.vmem %s3, %s278
        %s280 = scalar_lea.vmem [#allocation2], 1
        %s281 = scalar_lea.sflag [#allocation3], 1
        %p283 = scmp.lt.u32.totalorder 1, 8
        %p284 = pneg %p283
        // Predicated region
        $region71: #{tpu_custom_call.1} parent=39 // pred_check
          _
        $region72: #{tpu_custom_call.1} parent=39 // pred_check_branch
          %286 = sbr.rel (%p283) target = $region74
        $region73: #{tpu_custom_call.1} parent=39 // pred_region
          %s301 = sand.u32 1, 7
          %p302 = scmp.eq.s32.totalorder %s301, 0
          %p303 = pneg %p302
          // Predicated region
          $region86: #{tpu_custom_call.1} parent=73 // pred_check
            _
          $region87: #{tpu_custom_call.1} parent=73 // pred_check_branch
            %305 = sbr.rel (%p302) target = $region89
          $region88: #{tpu_custom_call.1} parent=73 // pred_region
            %s306 = sand.u32 1, 7
            %s307 = ssub.s32 1, %s306
            %s308 = scalar_lea.vmem %s279, %s307
            %s309 = ssub.s32 1, %s306
            %s310 = scalar_lea.vmem %s280, %s309 [#allocation2]
            %s311 = sshllo.u32 0, %s306
            loop: start=0, step=1, limit=1
            $region90: #{tpu_custom_call.1} parent=88 // loop_pre_header
              _
            $region91: #{tpu_custom_call.1} parent=88 // loop_header
              %s313 = sphi 0, %s317
              %p314 = scmp.ge.s32.totalorder %s313, 1
              %s318 = sphi %s308, %s308
              %s319 = sphi %s310, %s310
            $region92: #{tpu_custom_call.1} parent=88 // loop_header_branch
              %316 = sbr.rel (%p314) target = $region96
            $region93: #{tpu_custom_call.1} parent=88 // loop_body
              %v320 = vld [vmem:[%s318] sm:%s311]
              %321 = vst [vmem:[%s319] sm:%s311] %v320
            $region94: #{tpu_custom_call.1} parent=88 // loop_footer
              %s317 = sadd.s32 1, %s313
            $region95: #{tpu_custom_call.1} parent=88 // loop_footer_branch
              %312 = sbr.rel target = $region91
            $region96: #{tpu_custom_call.1} parent=88 // loop_exit
              _
          $region89: #{tpu_custom_call.1} parent=73 // pred_fallthru
            _
        $region74: #{tpu_custom_call.1} parent=39 // pred_fallthru
          _
        // Predicated region
        $region75: #{tpu_custom_call.1} parent=39 // pred_check
          %p287 = pneg %p283
        $region76: #{tpu_custom_call.1} parent=39 // pred_check_branch
          %289 = sbr.rel (%p287) target = $region78
        $region77: #{tpu_custom_call.1} parent=39 // pred_region
          %s290 = sshllo.u32 0, 1
          loop: start=0, step=1, limit=1
          $region79: #{tpu_custom_call.1} parent=77 // loop_pre_header
            _
          $region80: #{tpu_custom_call.1} parent=77 // loop_header
            %s292 = sphi 0, %s296
            %p293 = scmp.ge.s32.totalorder %s292, 1
            %s297 = sphi %s279, %s279
            %s298 = sphi %s280, %s280
          $region81: #{tpu_custom_call.1} parent=77 // loop_header_branch
            %295 = sbr.rel (%p293) target = $region85
          $region82: #{tpu_custom_call.1} parent=77 // loop_body
            %v299 = vld [vmem:[%s297] sm:%s290]
            %300 = vst [vmem:[%s298] sm:%s290] %v299
          $region83: #{tpu_custom_call.1} parent=77 // loop_footer
            %s296 = sadd.s32 1, %s292
          $region84: #{tpu_custom_call.1} parent=77 // loop_footer_branch
            %291 = sbr.rel target = $region80
          $region85: #{tpu_custom_call.1} parent=77 // loop_exit
            _
        $region78: #{tpu_custom_call.1} parent=39 // pred_fallthru
          _
        // Predicated region
        $region97: #{tpu_custom_call.1} parent=39 // pred_check
          _
        $region98: #{tpu_custom_call.1} parent=39 // pred_check_branch
          %324 = sbr.rel (0) target = $region100
        $region99: #{tpu_custom_call.1} parent=39 // pred_region
          %325 = vsyncadd %s281, 16
        $region100: #{tpu_custom_call.1} parent=39 // pred_fallthru
          _
        %s326 = sadd.s32 %s230, 2
        %s327 = sld [smem:[#allocation5 + %s326]]
        %s328 = scalar_lea.vmem %s3, %s327
        %s329 = scalar_lea.vmem [#allocation2], 2
        %s330 = scalar_lea.sflag [#allocation3], 2
        %p332 = scmp.lt.u32.totalorder 1, 8
        %p333 = pneg %p332
        // Predicated region
        $region101: #{tpu_custom_call.1} parent=39 // pred_check
          _
        $region102: #{tpu_custom_call.1} parent=39 // pred_check_branch
          %335 = sbr.rel (%p332) target = $region104
        $region103: #{tpu_custom_call.1} parent=39 // pred_region
          %s350 = sand.u32 1, 7
          %p351 = scmp.eq.s32.totalorder %s350, 0
          %p352 = pneg %p351
          // Predicated region
          $region116: #{tpu_custom_call.1} parent=103 // pred_check
            _
          $region117: #{tpu_custom_call.1} parent=103 // pred_check_branch
            %354 = sbr.rel (%p351) target = $region119
          $region118: #{tpu_custom_call.1} parent=103 // pred_region
            %s355 = sand.u32 1, 7
            %s356 = ssub.s32 1, %s355
            %s357 = scalar_lea.vmem %s328, %s356
            %s358 = ssub.s32 1, %s355
            %s359 = scalar_lea.vmem %s329, %s358 [#allocation2]
            %s360 = sshllo.u32 0, %s355
            loop: start=0, step=1, limit=1
            $region120: #{tpu_custom_call.1} parent=118 // loop_pre_header
              _
            $region121: #{tpu_custom_call.1} parent=118 // loop_header
              %s362 = sphi 0, %s366
              %p363 = scmp.ge.s32.totalorder %s362, 1
              %s367 = sphi %s357, %s357
              %s368 = sphi %s359, %s359
            $region122: #{tpu_custom_call.1} parent=118 // loop_header_branch
              %365 = sbr.rel (%p363) target = $region126
            $region123: #{tpu_custom_call.1} parent=118 // loop_body
              %v369 = vld [vmem:[%s367] sm:%s360]
              %370 = vst [vmem:[%s368] sm:%s360] %v369
            $region124: #{tpu_custom_call.1} parent=118 // loop_footer
              %s366 = sadd.s32 1, %s362
            $region125: #{tpu_custom_call.1} parent=118 // loop_footer_branch
              %361 = sbr.rel target = $region121
            $region126: #{tpu_custom_call.1} parent=118 // loop_exit
              _
          $region119: #{tpu_custom_call.1} parent=103 // pred_fallthru
            _
        $region104: #{tpu_custom_call.1} parent=39 // pred_fallthru
          _
        // Predicated region
        $region105: #{tpu_custom_call.1} parent=39 // pred_check
          %p336 = pneg %p332
        $region106: #{tpu_custom_call.1} parent=39 // pred_check_branch
          %338 = sbr.rel (%p336) target = $region108
        $region107: #{tpu_custom_call.1} parent=39 // pred_region
          %s339 = sshllo.u32 0, 1
          loop: start=0, step=1, limit=1
          $region109: #{tpu_custom_call.1} parent=107 // loop_pre_header
            _
          $region110: #{tpu_custom_call.1} parent=107 // loop_header
            %s341 = sphi 0, %s345
            %p342 = scmp.ge.s32.totalorder %s341, 1
            %s346 = sphi %s328, %s328
            %s347 = sphi %s329, %s329
          $region111: #{tpu_custom_call.1} parent=107 // loop_header_branch
            %344 = sbr.rel (%p342) target = $region115
          $region112: #{tpu_custom_call.1} parent=107 // loop_body
            %v348 = vld [vmem:[%s346] sm:%s339]
            %349 = vst [vmem:[%s347] sm:%s339] %v348
          $region113: #{tpu_custom_call.1} parent=107 // loop_footer
            %s345 = sadd.s32 1, %s341
          $region114: #{tpu_custom_call.1} parent=107 // loop_footer_branch
            %340 = sbr.rel target = $region110
          $region115: #{tpu_custom_call.1} parent=107 // loop_exit
            _
        $region108: #{tpu_custom_call.1} parent=39 // pred_fallthru
          _
        // Predicated region
        $region127: #{tpu_custom_call.1} parent=39 // pred_check
          _
        $region128: #{tpu_custom_call.1} parent=39 // pred_check_branch
          %373 = sbr.rel (0) target = $region130
        $region129: #{tpu_custom_call.1} parent=39 // pred_region
          %374 = vsyncadd %s330, 16
        $region130: #{tpu_custom_call.1} parent=39 // pred_fallthru
          _
        %s375 = sadd.s32 %s230, 3
        %s376 = sld [smem:[#allocation5 + %s375]]
        %s377 = scalar_lea.vmem %s3, %s376
        %s378 = scalar_lea.vmem [#allocation2], 3
        %s379 = scalar_lea.sflag [#allocation3], 3
        %p381 = scmp.lt.u32.totalorder 1, 8
        %p382 = pneg %p381
        // Predicated region
        $region131: #{tpu_custom_call.1} parent=39 // pred_check
          _
        $region132: #{tpu_custom_call.1} parent=39 // pred_check_branch
          %384 = sbr.rel (%p381) target = $region134
        $region133: #{tpu_custom_call.1} parent=39 // pred_region
          %s399 = sand.u32 1, 7
          %p400 = scmp.eq.s32.totalorder %s399, 0
          %p401 = pneg %p400
          // Predicated region
          $region146: #{tpu_custom_call.1} parent=133 // pred_check
            _
          $region147: #{tpu_custom_call.1} parent=133 // pred_check_branch
            %403 = sbr.rel (%p400) target = $region149
          $region148: #{tpu_custom_call.1} parent=133 // pred_region
            %s404 = sand.u32 1, 7
            %s405 = ssub.s32 1, %s404
            %s406 = scalar_lea.vmem %s377, %s405
            %s407 = ssub.s32 1, %s404
            %s408 = scalar_lea.vmem %s378, %s407 [#allocation2]
            %s409 = sshllo.u32 0, %s404
            loop: start=0, step=1, limit=1
            $region150: #{tpu_custom_call.1} parent=148 // loop_pre_header
              _
            $region151: #{tpu_custom_call.1} parent=148 // loop_header
              %s411 = sphi 0, %s415
              %p412 = scmp.ge.s32.totalorder %s411, 1
              %s416 = sphi %s406, %s406
              %s417 = sphi %s408, %s408
            $region152: #{tpu_custom_call.1} parent=148 // loop_header_branch
              %414 = sbr.rel (%p412) target = $region156
            $region153: #{tpu_custom_call.1} parent=148 // loop_body
              %v418 = vld [vmem:[%s416] sm:%s409]
              %419 = vst [vmem:[%s417] sm:%s409] %v418
            $region154: #{tpu_custom_call.1} parent=148 // loop_footer
              %s415 = sadd.s32 1, %s411
            $region155: #{tpu_custom_call.1} parent=148 // loop_footer_branch
              %410 = sbr.rel target = $region151
            $region156: #{tpu_custom_call.1} parent=148 // loop_exit
              _
          $region149: #{tpu_custom_call.1} parent=133 // pred_fallthru
            _
        $region134: #{tpu_custom_call.1} parent=39 // pred_fallthru
          _
        // Predicated region
        $region135: #{tpu_custom_call.1} parent=39 // pred_check
          %p385 = pneg %p381
        $region136: #{tpu_custom_call.1} parent=39 // pred_check_branch
          %387 = sbr.rel (%p385) target = $region138
        $region137: #{tpu_custom_call.1} parent=39 // pred_region
          %s388 = sshllo.u32 0, 1
          loop: start=0, step=1, limit=1
          $region139: #{tpu_custom_call.1} parent=137 // loop_pre_header
            _
          $region140: #{tpu_custom_call.1} parent=137 // loop_header
            %s390 = sphi 0, %s394
            %p391 = scmp.ge.s32.totalorder %s390, 1
            %s395 = sphi %s377, %s377
            %s396 = sphi %s378, %s378
          $region141: #{tpu_custom_call.1} parent=137 // loop_header_branch
            %393 = sbr.rel (%p391) target = $region145
          $region142: #{tpu_custom_call.1} parent=137 // loop_body
            %v397 = vld [vmem:[%s395] sm:%s388]
            %398 = vst [vmem:[%s396] sm:%s388] %v397
          $region143: #{tpu_custom_call.1} parent=137 // loop_footer
            %s394 = sadd.s32 1, %s390
          $region144: #{tpu_custom_call.1} parent=137 // loop_footer_branch
            %389 = sbr.rel target = $region140
          $region145: #{tpu_custom_call.1} parent=137 // loop_exit
            _
        $region138: #{tpu_custom_call.1} parent=39 // pred_fallthru
          _
        // Predicated region
        $region157: #{tpu_custom_call.1} parent=39 // pred_check
          _
        $region158: #{tpu_custom_call.1} parent=39 // pred_check_branch
          %422 = sbr.rel (0) target = $region160
        $region159: #{tpu_custom_call.1} parent=39 // pred_region
          %423 = vsyncadd %s379, 16
        $region160: #{tpu_custom_call.1} parent=39 // pred_fallthru
          _
        %s424 = sadd.s32 %s230, 4
        %s425 = sld [smem:[#allocation5 + %s424]]
        %s426 = scalar_lea.vmem %s3, %s425
        %s427 = scalar_lea.vmem [#allocation2], 4
        %s428 = scalar_lea.sflag [#allocation3], 4
        %p430 = scmp.lt.u32.totalorder 1, 8
        %p431 = pneg %p430
        // Predicated region
        $region161: #{tpu_custom_call.1} parent=39 // pred_check
          _
        $region162: #{tpu_custom_call.1} parent=39 // pred_check_branch
          %433 = sbr.rel (%p430) target = $region164
        $region163: #{tpu_custom_call.1} parent=39 // pred_region
          %s448 = sand.u32 1, 7
          %p449 = scmp.eq.s32.totalorder %s448, 0
          %p450 = pneg %p449
          // Predicated region
          $region176: #{tpu_custom_call.1} parent=163 // pred_check
            _
          $region177: #{tpu_custom_call.1} parent=163 // pred_check_branch
            %452 = sbr.rel (%p449) target = $region179
          $region178: #{tpu_custom_call.1} parent=163 // pred_region
            %s453 = sand.u32 1, 7
            %s454 = ssub.s32 1, %s453
            %s455 = scalar_lea.vmem %s426, %s454
            %s456 = ssub.s32 1, %s453
            %s457 = scalar_lea.vmem %s427, %s456 [#allocation2]
            %s458 = sshllo.u32 0, %s453
            loop: start=0, step=1, limit=1
            $region180: #{tpu_custom_call.1} parent=178 // loop_pre_header
              _
            $region181: #{tpu_custom_call.1} parent=178 // loop_header
              %s460 = sphi 0, %s464
              %p461 = scmp.ge.s32.totalorder %s460, 1
              %s465 = sphi %s455, %s455
              %s466 = sphi %s457, %s457
            $region182: #{tpu_custom_call.1} parent=178 // loop_header_branch
              %463 = sbr.rel (%p461) target = $region186
            $region183: #{tpu_custom_call.1} parent=178 // loop_body
              %v467 = vld [vmem:[%s465] sm:%s458]
              %468 = vst [vmem:[%s466] sm:%s458] %v467
            $region184: #{tpu_custom_call.1} parent=178 // loop_footer
              %s464 = sadd.s32 1, %s460
            $region185: #{tpu_custom_call.1} parent=178 // loop_footer_branch
              %459 = sbr.rel target = $region181
            $region186: #{tpu_custom_call.1} parent=178 // loop_exit
              _
          $region179: #{tpu_custom_call.1} parent=163 // pred_fallthru
            _
        $region164: #{tpu_custom_call.1} parent=39 // pred_fallthru
          _
        // Predicated region
        $region165: #{tpu_custom_call.1} parent=39 // pred_check
          %p434 = pneg %p430
        $region166: #{tpu_custom_call.1} parent=39 // pred_check_branch
          %436 = sbr.rel (%p434) target = $region168
        $region167: #{tpu_custom_call.1} parent=39 // pred_region
          %s437 = sshllo.u32 0, 1
          loop: start=0, step=1, limit=1
          $region169: #{tpu_custom_call.1} parent=167 // loop_pre_header
            _
          $region170: #{tpu_custom_call.1} parent=167 // loop_header
            %s439 = sphi 0, %s443
            %p440 = scmp.ge.s32.totalorder %s439, 1
            %s444 = sphi %s426, %s426
            %s445 = sphi %s427, %s427
          $region171: #{tpu_custom_call.1} parent=167 // loop_header_branch
            %442 = sbr.rel (%p440) target = $region175
          $region172: #{tpu_custom_call.1} parent=167 // loop_body
            %v446 = vld [vmem:[%s444] sm:%s437]
            %447 = vst [vmem:[%s445] sm:%s437] %v446
          $region173: #{tpu_custom_call.1} parent=167 // loop_footer
            %s443 = sadd.s32 1, %s439
          $region174: #{tpu_custom_call.1} parent=167 // loop_footer_branch
            %438 = sbr.rel target = $region170
          $region175: #{tpu_custom_call.1} parent=167 // loop_exit
            _
        $region168: #{tpu_custom_call.1} parent=39 // pred_fallthru
          _
        // Predicated region
        $region187: #{tpu_custom_call.1} parent=39 // pred_check
          _
        $region188: #{tpu_custom_call.1} parent=39 // pred_check_branch
          %471 = sbr.rel (0) target = $region190
        $region189: #{tpu_custom_call.1} parent=39 // pred_region
          %472 = vsyncadd %s428, 16
        $region190: #{tpu_custom_call.1} parent=39 // pred_fallthru
          _
        %s473 = sadd.s32 %s230, 5
        %s474 = sld [smem:[#allocation5 + %s473]]
        %s475 = scalar_lea.vmem %s3, %s474
        %s476 = scalar_lea.vmem [#allocation2], 5
        %s477 = scalar_lea.sflag [#allocation3], 5
        %p479 = scmp.lt.u32.totalorder 1, 8
        %p480 = pneg %p479
        // Predicated region
        $region191: #{tpu_custom_call.1} parent=39 // pred_check
          _
        $region192: #{tpu_custom_call.1} parent=39 // pred_check_branch
          %482 = sbr.rel (%p479) target = $region194
        $region193: #{tpu_custom_call.1} parent=39 // pred_region
          %s497 = sand.u32 1, 7
          %p498 = scmp.eq.s32.totalorder %s497, 0
          %p499 = pneg %p498
          // Predicated region
          $region206: #{tpu_custom_call.1} parent=193 // pred_check
            _
          $region207: #{tpu_custom_call.1} parent=193 // pred_check_branch
            %501 = sbr.rel (%p498) target = $region209
          $region208: #{tpu_custom_call.1} parent=193 // pred_region
            %s502 = sand.u32 1, 7
            %s503 = ssub.s32 1, %s502
            %s504 = scalar_lea.vmem %s475, %s503
            %s505 = ssub.s32 1, %s502
            %s506 = scalar_lea.vmem %s476, %s505 [#allocation2]
            %s507 = sshllo.u32 0, %s502
            loop: start=0, step=1, limit=1
            $region210: #{tpu_custom_call.1} parent=208 // loop_pre_header
              _
            $region211: #{tpu_custom_call.1} parent=208 // loop_header
              %s509 = sphi 0, %s513
              %p510 = scmp.ge.s32.totalorder %s509, 1
              %s514 = sphi %s504, %s504
              %s515 = sphi %s506, %s506
            $region212: #{tpu_custom_call.1} parent=208 // loop_header_branch
              %512 = sbr.rel (%p510) target = $region216
            $region213: #{tpu_custom_call.1} parent=208 // loop_body
              %v516 = vld [vmem:[%s514] sm:%s507]
              %517 = vst [vmem:[%s515] sm:%s507] %v516
            $region214: #{tpu_custom_call.1} parent=208 // loop_footer
              %s513 = sadd.s32 1, %s509
            $region215: #{tpu_custom_call.1} parent=208 // loop_footer_branch
              %508 = sbr.rel target = $region211
            $region216: #{tpu_custom_call.1} parent=208 // loop_exit
              _
          $region209: #{tpu_custom_call.1} parent=193 // pred_fallthru
            _
        $region194: #{tpu_custom_call.1} parent=39 // pred_fallthru
          _
        // Predicated region
        $region195: #{tpu_custom_call.1} parent=39 // pred_check
          %p483 = pneg %p479
        $region196: #{tpu_custom_call.1} parent=39 // pred_check_branch
          %485 = sbr.rel (%p483) target = $region198
        $region197: #{tpu_custom_call.1} parent=39 // pred_region
          %s486 = sshllo.u32 0, 1
          loop: start=0, step=1, limit=1
          $region199: #{tpu_custom_call.1} parent=197 // loop_pre_header
            _
          $region200: #{tpu_custom_call.1} parent=197 // loop_header
            %s488 = sphi 0, %s492
            %p489 = scmp.ge.s32.totalorder %s488, 1
            %s493 = sphi %s475, %s475
            %s494 = sphi %s476, %s476
          $region201: #{tpu_custom_call.1} parent=197 // loop_header_branch
            %491 = sbr.rel (%p489) target = $region205
          $region202: #{tpu_custom_call.1} parent=197 // loop_body
            %v495 = vld [vmem:[%s493] sm:%s486]
            %496 = vst [vmem:[%s494] sm:%s486] %v495
          $region203: #{tpu_custom_call.1} parent=197 // loop_footer
            %s492 = sadd.s32 1, %s488
          $region204: #{tpu_custom_call.1} parent=197 // loop_footer_branch
            %487 = sbr.rel target = $region200
          $region205: #{tpu_custom_call.1} parent=197 // loop_exit
            _
        $region198: #{tpu_custom_call.1} parent=39 // pred_fallthru
          _
        // Predicated region
        $region217: #{tpu_custom_call.1} parent=39 // pred_check
          _
        $region218: #{tpu_custom_call.1} parent=39 // pred_check_branch
          %520 = sbr.rel (0) target = $region220
        $region219: #{tpu_custom_call.1} parent=39 // pred_region
          %521 = vsyncadd %s477, 16
        $region220: #{tpu_custom_call.1} parent=39 // pred_fallthru
          _
        %s522 = sadd.s32 %s230, 6
        %s523 = sld [smem:[#allocation5 + %s522]]
        %s524 = scalar_lea.vmem %s3, %s523
        %s525 = scalar_lea.vmem [#allocation2], 6
        %s526 = scalar_lea.sflag [#allocation3], 6
        %p528 = scmp.lt.u32.totalorder 1, 8
        %p529 = pneg %p528
        // Predicated region
        $region221: #{tpu_custom_call.1} parent=39 // pred_check
          _
        $region222: #{tpu_custom_call.1} parent=39 // pred_check_branch
          %531 = sbr.rel (%p528) target = $region224
        $region223: #{tpu_custom_call.1} parent=39 // pred_region
          %s546 = sand.u32 1, 7
          %p547 = scmp.eq.s32.totalorder %s546, 0
          %p548 = pneg %p547
          // Predicated region
          $region236: #{tpu_custom_call.1} parent=223 // pred_check
            _
          $region237: #{tpu_custom_call.1} parent=223 // pred_check_branch
            %550 = sbr.rel (%p547) target = $region239
          $region238: #{tpu_custom_call.1} parent=223 // pred_region
            %s551 = sand.u32 1, 7
            %s552 = ssub.s32 1, %s551
            %s553 = scalar_lea.vmem %s524, %s552
            %s554 = ssub.s32 1, %s551
            %s555 = scalar_lea.vmem %s525, %s554 [#allocation2]
            %s556 = sshllo.u32 0, %s551
            loop: start=0, step=1, limit=1
            $region240: #{tpu_custom_call.1} parent=238 // loop_pre_header
              _
            $region241: #{tpu_custom_call.1} parent=238 // loop_header
              %s558 = sphi 0, %s562
              %p559 = scmp.ge.s32.totalorder %s558, 1
              %s563 = sphi %s553, %s553
              %s564 = sphi %s555, %s555
            $region242: #{tpu_custom_call.1} parent=238 // loop_header_branch
              %561 = sbr.rel (%p559) target = $region246
            $region243: #{tpu_custom_call.1} parent=238 // loop_body
              %v565 = vld [vmem:[%s563] sm:%s556]
              %566 = vst [vmem:[%s564] sm:%s556] %v565
            $region244: #{tpu_custom_call.1} parent=238 // loop_footer
              %s562 = sadd.s32 1, %s558
            $region245: #{tpu_custom_call.1} parent=238 // loop_footer_branch
              %557 = sbr.rel target = $region241
            $region246: #{tpu_custom_call.1} parent=238 // loop_exit
              _
          $region239: #{tpu_custom_call.1} parent=223 // pred_fallthru
            _
        $region224: #{tpu_custom_call.1} parent=39 // pred_fallthru
          _
        // Predicated region
        $region225: #{tpu_custom_call.1} parent=39 // pred_check
          %p532 = pneg %p528
        $region226: #{tpu_custom_call.1} parent=39 // pred_check_branch
          %534 = sbr.rel (%p532) target = $region228
        $region227: #{tpu_custom_call.1} parent=39 // pred_region
          %s535 = sshllo.u32 0, 1
          loop: start=0, step=1, limit=1
          $region229: #{tpu_custom_call.1} parent=227 // loop_pre_header
            _
          $region230: #{tpu_custom_call.1} parent=227 // loop_header
            %s537 = sphi 0, %s541
            %p538 = scmp.ge.s32.totalorder %s537, 1
            %s542 = sphi %s524, %s524
            %s543 = sphi %s525, %s525
          $region231: #{tpu_custom_call.1} parent=227 // loop_header_branch
            %540 = sbr.rel (%p538) target = $region235
          $region232: #{tpu_custom_call.1} parent=227 // loop_body
            %v544 = vld [vmem:[%s542] sm:%s535]
            %545 = vst [vmem:[%s543] sm:%s535] %v544
          $region233: #{tpu_custom_call.1} parent=227 // loop_footer
            %s541 = sadd.s32 1, %s537
          $region234: #{tpu_custom_call.1} parent=227 // loop_footer_branch
            %536 = sbr.rel target = $region230
          $region235: #{tpu_custom_call.1} parent=227 // loop_exit
            _
        $region228: #{tpu_custom_call.1} parent=39 // pred_fallthru
          _
        // Predicated region
        $region247: #{tpu_custom_call.1} parent=39 // pred_check
          _
        $region248: #{tpu_custom_call.1} parent=39 // pred_check_branch
          %569 = sbr.rel (0) target = $region250
        $region249: #{tpu_custom_call.1} parent=39 // pred_region
          %570 = vsyncadd %s526, 16
        $region250: #{tpu_custom_call.1} parent=39 // pred_fallthru
          _
        %s571 = sadd.s32 %s230, 7
        %s572 = sld [smem:[#allocation5 + %s571]]
        %s573 = scalar_lea.vmem %s3, %s572
        %s574 = scalar_lea.vmem [#allocation2], 7
        %s575 = scalar_lea.sflag [#allocation3], 7
        %p577 = scmp.lt.u32.totalorder 1, 8
        %p578 = pneg %p577
        // Predicated region
        $region251: #{tpu_custom_call.1} parent=39 // pred_check
          _
        $region252: #{tpu_custom_call.1} parent=39 // pred_check_branch
          %580 = sbr.rel (%p577) target = $region254
        $region253: #{tpu_custom_call.1} parent=39 // pred_region
          %s595 = sand.u32 1, 7
          %p596 = scmp.eq.s32.totalorder %s595, 0
          %p597 = pneg %p596
          // Predicated region
          $region266: #{tpu_custom_call.1} parent=253 // pred_check
            _
          $region267: #{tpu_custom_call.1} parent=253 // pred_check_branch
            %599 = sbr.rel (%p596) target = $region269
          $region268: #{tpu_custom_call.1} parent=253 // pred_region
            %s600 = sand.u32 1, 7
            %s601 = ssub.s32 1, %s600
            %s602 = scalar_lea.vmem %s573, %s601
            %s603 = ssub.s32 1, %s600
            %s604 = scalar_lea.vmem %s574, %s603 [#allocation2]
            %s605 = sshllo.u32 0, %s600
            loop: start=0, step=1, limit=1
            $region270: #{tpu_custom_call.1} parent=268 // loop_pre_header
              _
            $region271: #{tpu_custom_call.1} parent=268 // loop_header
              %s607 = sphi 0, %s611
              %p608 = scmp.ge.s32.totalorder %s607, 1
              %s612 = sphi %s602, %s602
              %s613 = sphi %s604, %s604
            $region272: #{tpu_custom_call.1} parent=268 // loop_header_branch
              %610 = sbr.rel (%p608) target = $region276
            $region273: #{tpu_custom_call.1} parent=268 // loop_body
              %v614 = vld [vmem:[%s612] sm:%s605]
              %615 = vst [vmem:[%s613] sm:%s605] %v614
            $region274: #{tpu_custom_call.1} parent=268 // loop_footer
              %s611 = sadd.s32 1, %s607
            $region275: #{tpu_custom_call.1} parent=268 // loop_footer_branch
              %606 = sbr.rel target = $region271
            $region276: #{tpu_custom_call.1} parent=268 // loop_exit
              _
          $region269: #{tpu_custom_call.1} parent=253 // pred_fallthru
            _
        $region254: #{tpu_custom_call.1} parent=39 // pred_fallthru
          _
        // Predicated region
        $region255: #{tpu_custom_call.1} parent=39 // pred_check
          %p581 = pneg %p577
        $region256: #{tpu_custom_call.1} parent=39 // pred_check_branch
          %583 = sbr.rel (%p581) target = $region258
        $region257: #{tpu_custom_call.1} parent=39 // pred_region
          %s584 = sshllo.u32 0, 1
          loop: start=0, step=1, limit=1
          $region259: #{tpu_custom_call.1} parent=257 // loop_pre_header
            _
          $region260: #{tpu_custom_call.1} parent=257 // loop_header
            %s586 = sphi 0, %s590
            %p587 = scmp.ge.s32.totalorder %s586, 1
            %s591 = sphi %s573, %s573
            %s592 = sphi %s574, %s574
          $region261: #{tpu_custom_call.1} parent=257 // loop_header_branch
            %589 = sbr.rel (%p587) target = $region265
          $region262: #{tpu_custom_call.1} parent=257 // loop_body
            %v593 = vld [vmem:[%s591] sm:%s584]
            %594 = vst [vmem:[%s592] sm:%s584] %v593
          $region263: #{tpu_custom_call.1} parent=257 // loop_footer
            %s590 = sadd.s32 1, %s586
          $region264: #{tpu_custom_call.1} parent=257 // loop_footer_branch
            %585 = sbr.rel target = $region260
          $region265: #{tpu_custom_call.1} parent=257 // loop_exit
            _
        $region258: #{tpu_custom_call.1} parent=39 // pred_fallthru
          _
        // Predicated region
        $region277: #{tpu_custom_call.1} parent=39 // pred_check
          _
        $region278: #{tpu_custom_call.1} parent=39 // pred_check_branch
          %618 = sbr.rel (0) target = $region280
        $region279: #{tpu_custom_call.1} parent=39 // pred_region
          %619 = vsyncadd %s575, 16
        $region280: #{tpu_custom_call.1} parent=39 // pred_fallthru
          _
        %s620 = sld [smem:[#allocation6]]
        %s621 = scalar_lea.vmem %s5, %s620
        %v622 = vld [vmem:[%s621] sm:$0xff]
        %v623 = vld [vmem:[%s229] sm:$0xff]
        %v624 = vld [vmem:[%s4] sm:$0x1]
        %vm625 = vcmp.eq.s32.totalorder %v623, 0
        %v626 = vsel %vm625, 1, 0
        %627 = vset.pattern.permute.xlu0 0
        %628 = vperm.xlu0 %627, %v626
        %v629 = vpop.permute.xlu0 %628
        %vm630 = vcmp.eq.s32.totalorder %v629, 1
        %v631 = vlaneseq
        %v632 = vshrl.u32 %v631, 7
        %v633 = vsub.s32 0, %v632
        %v634 = vrot.slane %v624, %v633
        %v635 = vsel %vm630, %v634, 0.0
        %v636 = vadd.f32 %v622, %v635
        %v637 = vld [vmem:[%s4 + $0x1] sm:$0x1]
        %vm638 = vcmp.eq.s32.totalorder %v623, 1
        %v639 = vsel %vm638, 1, 0
        %640 = vset.pattern.permute.xlu0 0
        %641 = vperm.xlu0 %640, %v639
        %v642 = vpop.permute.xlu0 %641
        %vm643 = vcmp.eq.s32.totalorder %v642, 1
        %v644 = vlaneseq
        %v645 = vshrl.u32 %v644, 7
        %v646 = vsub.s32 0, %v645
        %v647 = vrot.slane %v637, %v646
        %v648 = vsel %vm643, %v647, 0.0
        %v649 = vadd.f32 %v636, %v648
        %651 = dma.done [#allocation3], 16
        %653 = dma.done %s281, 16
        %655 = dma.done %s330, 16
        %657 = dma.done %s379, 16
        %659 = dma.done %s428, 16
        %661 = dma.done %s477, 16
        %663 = dma.done %s526, 16
        %665 = dma.done %s575, 16
        %v666 = vld [vmem:[#allocation2] sm:$0xff]
        %v667 = vadd.f32 %v649, %v666
        %vm668 = vcmask 261120
        %v669 = vsel %vm668, %v667, 0.0
        %670 = vadd.xlane.f32.xlu0 %v669
        %v671 = vpop.xlane.xlu0 %670
        %v672 = vrcp.pop 32.0
        %v673 = vmul.f32 %v671, %v672
        %v674 = vsub.f32 %v667, %v673
        %v675 = vmul.f32 %v674, %v674
        %v676 = vsel %vm668, %v675, 0.0
        %677 = vadd.xlane.f32.xlu0 %v676
        %v678 = vpop.xlane.xlu0 %677
        %v679 = vmul.f32 %v678, %v672
        %v680 = vadd.f32 %v679, 1e-12
        %v681 = vrsqrt.pop %v680
        %v682 = vmul.f32 %v674, %v681
        %v683 = vld [vmem:[%s6] sm:$0x1]
        %v685 = vlaneseq
        %v686 = vshrl.u32 %v685, 7
        %v687 = vsub.s32 0, %v686
        %v688 = vrot.slane %v683, %v687
        %v690 = vmul.f32 %v682, %v688
        %v691 = vld [vmem:[%s7] sm:$0x1]
        %v693 = vlaneseq
        %v694 = vshrl.u32 %v693, 7
        %v695 = vsub.s32 0, %v694
        %v696 = vrot.slane %v691, %v695
        %v698 = vadd.f32 %v690, %v696
        %699 = vst.msk [vmem:[%s225] sm:$0xff] %vm668, %v698
        %s700 = sand.u32 %s147, 1
        %s701 = scalar_lea.sflag [#allocation8], %s700
        %s702 = sand.u32 %s147, 1
        %s703 = smul.addr %s702, 8
        %s704 = scalar_lea.vmem [#allocation7], %s703
        // Predicated region
        $region281: #{tpu_custom_call.1} parent=39 // pred_check
          %p705 = pneg %p157
        $region282: #{tpu_custom_call.1} parent=39 // pred_check_branch
          %707 = sbr.rel (%p705) target = $region284
        $region283: #{tpu_custom_call.1} parent=39 // pred_region
          %s709 = ssub.s32 128, 128
          %710 = vsyncadd %s701, %s709
          %s711 = smul.addr %s29, 128
          %s712 = scalar_lea.hbm %s8, %s711
          %s714 = sshll.u32 %s704, 4
          %s715 = int_to_ptr.vmem [resolvable:$true] %s714
          %717 = dma.vmem_to_hbm [thread:$0]  %s715, 128, %s712, %s701
        $region284: #{tpu_custom_call.1} parent=39 // pred_fallthru
          _
      $region40: #{tpu_custom_call.1} parent=5 // pred_fallthru
        _
      %p718 = scmp.le.s32.totalorder 2, %s24
      // Predicated region
      $region285: #{tpu_custom_call.1} parent=5 // pred_check
        %p719 = pneg %p718
      $region286: #{tpu_custom_call.1} parent=5 // pred_check_branch
        %721 = sbr.rel (%p719) target = $region288
      $region287: #{tpu_custom_call.1} parent=5 // pred_region
        %s722 = ssub.s32 %s24, 2
        // Predicated region
        $region289: #{tpu_custom_call.1} parent=287 // pred_check
          %p723 = pneg %p163
        $region290: #{tpu_custom_call.1} parent=287 // pred_check_branch
          %725 = sbr.rel (%p723) target = $region292
        $region291: #{tpu_custom_call.1} parent=287 // pred_region
          %s726 = sand.u32 %s148, 1
          %s727 = scalar_lea.sflag [#allocation8], %s726
          %s728 = sand.u32 %s148, 1
          %s729 = smul.addr %s728, 8
          %s730 = scalar_lea.vmem [#allocation7], %s729
          %731 = dma.done %s727, 128
        $region292: #{tpu_custom_call.1} parent=287 // pred_fallthru
          _
      $region288: #{tpu_custom_call.1} parent=5 // pred_fallthru
        _
    $region6: #{tpu_custom_call.1} parent=1 // loop_footer
      %s28 = sadd.s32 1, %s24
    $region7: #{tpu_custom_call.1} parent=1 // loop_footer_branch
      %23 = sbr.rel target = $region3
    $region8: #{tpu_custom_call.1} parent=1 // loop_exit
      _
    %732 = vsyncpa [#allocation8], 1
    %s733 = scalar_lea.sflag [#allocation8], 1
    %734 = vsyncpa %s733, 1
  %735 = vsyncmov [#allocation3]
  %s736 = vpop.sfrf %735
  %p737 = scmp.eq.s32.totalorder %s736, 0
  %p738 = pneg %p737
  %740 = shalt.err (%p738)
  %s741 = scalar_lea.sflag [#allocation3], 1
  %742 = vsyncmov %s741
  %s743 = vpop.sfrf %742
  %p744 = scmp.eq.s32.totalorder %s743, 0
  %p745 = pneg %p744
  %747 = shalt.err (%p745)
  %s748 = scalar_lea.sflag [#allocation3], 2
  %749 = vsyncmov %s748
  %s750 = vpop.sfrf %749
  %p751 = scmp.eq.s32.totalorder %s750, 0
  %p752 = pneg %p751
  %754 = shalt.err (%p752)
  %s755 = scalar_lea.sflag [#allocation3], 3
  %756 = vsyncmov %s755
  %s757 = vpop.sfrf %756
  %p758 = scmp.eq.s32.totalorder %s757, 0
  %p759 = pneg %p758
  %761 = shalt.err (%p759)
  %s762 = scalar_lea.sflag [#allocation3], 4
  %763 = vsyncmov %s762
  %s764 = vpop.sfrf %763
  %p765 = scmp.eq.s32.totalorder %s764, 0
  %p766 = pneg %p765
  %768 = shalt.err (%p766)
  %s769 = scalar_lea.sflag [#allocation3], 5
  %770 = vsyncmov %s769
  %s771 = vpop.sfrf %770
  %p772 = scmp.eq.s32.totalorder %s771, 0
  %p773 = pneg %p772
  %775 = shalt.err (%p773)
  %s776 = scalar_lea.sflag [#allocation3], 6
  %777 = vsyncmov %s776
  %s778 = vpop.sfrf %777
  %p779 = scmp.eq.s32.totalorder %s778, 0
  %p780 = pneg %p779
  %782 = shalt.err (%p780)
  %s783 = scalar_lea.sflag [#allocation3], 7
  %784 = vsyncmov %s783
  %s785 = vpop.sfrf %784
  %p786 = scmp.eq.s32.totalorder %s785, 0
  %p787 = pneg %p786
  %789 = shalt.err (%p787)

</llo_original>
